<compile_context>
chip_gen: v5e
topology: v5e:2x2
jax: 0.10.0
libtpu: 0.0.40
codegen_flags: <defaults>
</compile_context>

<pallas_src>
import jax
import jax.numpy as jnp
from jax import lax
from jax.experimental import pallas as pl
from jax.experimental.pallas import tpu as pltpu

# Force full-f32 accuracy for the hoisted XLA matmuls so they match the
# f32 in-kernel recurrence / reference closely.
jax.config.update("jax_default_matmul_precision", "highest")


def _recurrence_kernel(xw_ref, s0_ref, wss_ref, states_ref):
    """Serial part only: s_t = tanh(xw[t] + s_{t-1} @ W_ss); states[t] = s_t."""
    T = xw_ref.shape[0]
    wss = wss_ref[...]  # (k_state, k_state) held resident for the whole loop

    def body(t, s):
        new_s = jnp.tanh(
            xw_ref[t]  # (bn, k_state) — input projection precomputed outside
            + jnp.dot(s, wss, preferred_element_type=jnp.float32)
        )
        states_ref[t] = new_s
        return new_s

    # State carried through the loop carry (vregs), not VMEM scratch.
    lax.fori_loop(0, T, body, s0_ref[...], unroll=(T <= 32))


def _pick_batch_tile(N, T, k_state, budget_bytes=8 << 20):
    """Largest batch tile dividing N that is a multiple of 8 and fits VMEM.
    Falls back to the full batch when N is not a multiple of 8 (the block
    shape must then equal the full array dim to satisfy the (8,128) rule).
    Budget is conservative so the same tiling also fits v7x's 64 MiB VMEM."""
    if N % 8 != 0:
        return N
    bn = N
    # ~double-buffered (xw block + states block), f32
    while bn > 8 and 4 * T * bn * k_state * 4 > budget_bytes:
        half = bn // 2
        if half % 8 == 0 and N % half == 0:
            bn = half
        else:
            break
    return bn


def rnn_forward(x, params, state0=None):
    """x: (B0, B1, T, k_in) float32. Returns (outputs, states) matching MODEL.forward."""
    B0, B1, T, k_in = x.shape
    wxs, wss, bs, wso, bo, state0_param = params
    k_state = wss.shape[0]
    k_out = wso.shape[1]
    N = B0 * B1

    # ---- Hoisted input projection: one big, MXU-efficient batched matmul.
    x_flat = x.reshape(N, T, k_in).astype(jnp.float32)
    xw = jnp.einsum("ntk,ks->tns", x_flat, wxs.astype(jnp.float32)) + bs  # (T, N, k_state)
    xw = xw.astype(jnp.float32)

    if state0 is None:
        s0 = jnp.broadcast_to(state0_param[None, :], (N, k_state))
    else:
        s0 = state0.reshape(N, k_state)
    s0 = s0.astype(jnp.float32)

    bn = _pick_batch_tile(N, T, k_state)

    # ---- Pallas kernel: only the serial recurrence.  Batch tiles are
    #      independent ("parallel" -> split across TCs on v7x); the time loop
    #      is inside the kernel so there is no per-step grid overhead.
    states_tns = pl.pallas_call(
        _recurrence_kernel,
        out_shape=jax.ShapeDtypeStruct((T, N, k_state), jnp.float32),
        grid_spec=pltpu.PrefetchScalarGridSpec(
            num_scalar_prefetch=0,
            grid=(N // bn,),
            in_specs=[
                pl.BlockSpec((T, bn, k_state), lambda b: (0, b, 0)),   # XW slab
                pl.BlockSpec((bn, k_state), lambda b: (b, 0)),         # state0 tile
                pl.BlockSpec((k_state, k_state), lambda b: (0, 0)),    # W_ss
            ],
            out_specs=pl.BlockSpec((T, bn, k_state), lambda b: (0, b, 0)),
        ),
        compiler_params=pltpu.CompilerParams(
            dimension_semantics=("parallel",),
        ),
    )(xw, s0, wss.astype(jnp.float32))

    # ---- Hoisted output projection: one big batched matmul after the recurrence.
    outs_tns = jnp.einsum("tns,so->tno", states_tns, wso.astype(jnp.float32)) + bo

    # Back to the PyTorch (B0, B1, T, feature) layout.
    outputs = jnp.transpose(outs_tns, (1, 0, 2)).reshape(B0, B1, T, k_out)
    states = jnp.transpose(states_tns, (1, 0, 2)).reshape(B0, B1, T, k_state)
    return outputs, states


def init_params(key, k_in, k_out, k_state):
    k1, k2, k3, k4, k5 = jax.random.split(key, 5)
    scale_in = 1.0 / jnp.sqrt(k_in)
    scale_st = 1.0 / jnp.sqrt(k_state)
    wxs = jax.random.uniform(k1, (k_in, k_state), jnp.float32, -scale_in, scale_in)
    wss = jax.random.uniform(k2, (k_state, k_state), jnp.float32, -scale_st, scale_st)
    bs = jax.random.uniform(k3, (k_state,), jnp.float32, -scale_st, scale_st)
    wso = jax.random.uniform(k4, (k_state, k_out), jnp.float32, -scale_st, scale_st)
    bo = jax.random.uniform(k5, (k_out,), jnp.float32, -scale_st, scale_st)
    state0_param = jnp.zeros((k_state,), jnp.float32)  # matches nn.Parameter(torch.zeros(k_state))
    return (wxs, wss, bs, wso, bo, state0_param)


def reference_forward(x, params, state0=None):
    """Pure-JAX reference of MODEL.forward with the same Elman cell."""
    wxs, wss, bs, wso, bo, state0_param = params
    B0, B1, T, _ = x.shape
    k_state = wss.shape[0]
    if state0 is None:
        state = jnp.broadcast_to(state0_param[None, None, None, :], (B0, B1, 1, k_state))
    else:
        state = state0
    outputs, states = [], []
    for i in range(T):
        x0 = x[:, :, i:i + 1, :]
        state = jnp.tanh(x0 @ wxs + state @ wss + bs)
        out = state @ wso + bo
        outputs.append(out)
        states.append(state)
    return jnp.concatenate(outputs, axis=2), jnp.concatenate(states, axis=2)


if __name__ == "__main__":
    k_in, k_out, k_state = 32, 16, 32
    B0, B1, T = 2, 2, 8

    key = jax.random.PRNGKey(0)
    kx, kp = jax.random.split(key)
    x = jax.random.normal(kx, (B0, B1, T, k_in), jnp.float32)
    params = init_params(kp, k_in, k_out, k_state)

    fwd = jax.jit(rnn_forward)
    outputs, states = fwd(x, params, None)
    jax.block_until_ready((outputs, states))

    ref_out, ref_st = reference_forward(x, params, None)
    assert outputs.shape == (B0, B1, T, k_out)
    assert states.shape == (B0, B1, T, k_state)
    assert jnp.allclose(outputs, ref_out, atol=1e-4, rtol=1e-4)
    assert jnp.allclose(states, ref_st, atol=1e-4, rtol=1e-4)

    print("KERNEL_OK")
</pallas_src>

<mosaic_0001>
module attributes {stable_mosaic.version = 11 : i64} {
  func.func @_recurrence_kernel(%arg0: i32, %arg1: memref<8x4x32xf32, #tpu.memory_space<vmem>>, %arg2: memref<4x32xf32, #tpu.memory_space<vmem>>, %arg3: memref<32x32xf32, #tpu.memory_space<vmem>>, %arg4: memref<8x4x32xf32, #tpu.memory_space<vmem>>) attributes {dimension_semantics = [#tpu.dimension_semantics<parallel>], iteration_bounds = array<i64: 1>, scalar_prefetch = 0 : i64, scratch_operands = 0 : i64, tpu.core_type = #tpu.core_type<tc>, window_params = [{transform_indices = @transform_0, window_bounds = array<i64: 8, 4, 32>}, {transform_indices = @transform_1, window_bounds = array<i64: 4, 32>}, {pipeline_mode = #tpu.pipeline_mode<synchronous>, transform_indices = @transform_2, window_bounds = array<i64: 32, 32>}, {transform_indices = @transform_3, window_bounds = array<i64: 8, 4, 32>}]} {
    %c0 = arith.constant 0 : index
    %c0_0 = arith.constant 0 : index
    %0 = vector.load %arg3[%c0, %c0_0] : memref<32x32xf32, #tpu.memory_space<vmem>>, vector<32x32xf32>
    %c0_1 = arith.constant 0 : index
    %c0_2 = arith.constant 0 : index
    %1 = vector.load %arg2[%c0_1, %c0_2] : memref<4x32xf32, #tpu.memory_space<vmem>>, vector<4x32xf32>
    %c0_i32 = arith.constant 0 : i32
    %2 = arith.index_cast %c0_i32 : i32 to index
    %c0_3 = arith.constant 0 : index
    %c0_4 = arith.constant 0 : index
    %3 = vector.load %arg1[%2, %c0_3, %c0_4] : memref<8x4x32xf32, #tpu.memory_space<vmem>>, vector<1x4x32xf32>
    %4 = vector.shape_cast %3 : vector<1x4x32xf32> to vector<4x32xf32>
    %cst = arith.constant dense<0.000000e+00> : vector<4x32xf32>
    %5 = tpu.matmul %1, %0, %cst {dimension_numbers = #tpu.dot_dimension_numbers<[1], [0], [0], [1], [0, 0, 1, 1], [], []>, precision = #tpu.contract_precision<fp32>} : vector<4x32xf32>, vector<32x32xf32>, vector<4x32xf32> -> vector<4x32xf32>
    %6 = arith.addf %4, %5 : vector<4x32xf32>
    %7 = math.tanh %6 : vector<4x32xf32>
    %8 = arith.index_cast %c0_i32 : i32 to index
    %c0_5 = arith.constant 0 : index
    %c0_6 = arith.constant 0 : index
    %9 = vector.load %arg4[%8, %c0_5, %c0_6] : memref<8x4x32xf32, #tpu.memory_space<vmem>>, vector<1x4x32xf32>
    %10 = vector.shape_cast %9 : vector<1x4x32xf32> to vector<4x32xf32>
    %11 = vector.shape_cast %7 : vector<4x32xf32> to vector<1x4x32xf32>
    tpu.vector_store %arg4[%8, %c0_5, %c0_6], %11 {strides = array<i32>} : memref<8x4x32xf32, #tpu.memory_space<vmem>>, vector<1x4x32xf32>,
    %c1_i32 = arith.constant 1 : i32
    %12 = arith.index_cast %c1_i32 : i32 to index
    %c0_7 = arith.constant 0 : index
    %c0_8 = arith.constant 0 : index
    %13 = vector.load %arg1[%12, %c0_7, %c0_8] : memref<8x4x32xf32, #tpu.memory_space<vmem>>, vector<1x4x32xf32>
    %14 = vector.shape_cast %13 : vector<1x4x32xf32> to vector<4x32xf32>
    %cst_9 = arith.constant dense<0.000000e+00> : vector<4x32xf32>
    %15 = tpu.matmul %7, %0, %cst_9 {dimension_numbers = #tpu.dot_dimension_numbers<[1], [0], [0], [1], [0, 0, 1, 1], [], []>, precision = #tpu.contract_precision<fp32>} : vector<4x32xf32>, vector<32x32xf32>, vector<4x32xf32> -> vector<4x32xf32>
    %16 = arith.addf %14, %15 : vector<4x32xf32>
    %17 = math.tanh %16 : vector<4x32xf32>
    %18 = arith.index_cast %c1_i32 : i32 to index
    %c0_10 = arith.constant 0 : index
    %c0_11 = arith.constant 0 : index
    %19 = vector.load %arg4[%18, %c0_10, %c0_11] : memref<8x4x32xf32, #tpu.memory_space<vmem>>, vector<1x4x32xf32>
    %20 = vector.shape_cast %19 : vector<1x4x32xf32> to vector<4x32xf32>
    %21 = vector.shape_cast %17 : vector<4x32xf32> to vector<1x4x32xf32>
    tpu.vector_store %arg4[%18, %c0_10, %c0_11], %21 {strides = array<i32>} : memref<8x4x32xf32, #tpu.memory_space<vmem>>, vector<1x4x32xf32>,
    %c2_i32 = arith.constant 2 : i32
    %22 = arith.index_cast %c2_i32 : i32 to index
    %c0_12 = arith.constant 0 : index
    %c0_13 = arith.constant 0 : index
    %23 = vector.load %arg1[%22, %c0_12, %c0_13] : memref<8x4x32xf32, #tpu.memory_space<vmem>>, vector<1x4x32xf32>
    %24 = vector.shape_cast %23 : vector<1x4x32xf32> to vector<4x32xf32>
    %cst_14 = arith.constant dense<0.000000e+00> : vector<4x32xf32>
    %25 = tpu.matmul %17, %0, %cst_14 {dimension_numbers = #tpu.dot_dimension_numbers<[1], [0], [0], [1], [0, 0, 1, 1], [], []>, precision = #tpu.contract_precision<fp32>} : vector<4x32xf32>, vector<32x32xf32>, vector<4x32xf32> -> vector<4x32xf32>
    %26 = arith.addf %24, %25 : vector<4x32xf32>
    %27 = math.tanh %26 : vector<4x32xf32>
    %28 = arith.index_cast %c2_i32 : i32 to index
    %c0_15 = arith.constant 0 : index
    %c0_16 = arith.constant 0 : index
    %29 = vector.load %arg4[%28, %c0_15, %c0_16] : memref<8x4x32xf32, #tpu.memory_space<vmem>>, vector<1x4x32xf32>
    %30 = vector.shape_cast %29 : vector<1x4x32xf32> to vector<4x32xf32>
    %31 = vector.shape_cast %27 : vector<4x32xf32> to vector<1x4x32xf32>
    tpu.vector_store %arg4[%28, %c0_15, %c0_16], %31 {strides = array<i32>} : memref<8x4x32xf32, #tpu.memory_space<vmem>>, vector<1x4x32xf32>,
    %c3_i32 = arith.constant 3 : i32
    %32 = arith.index_cast %c3_i32 : i32 to index
    %c0_17 = arith.constant 0 : index
    %c0_18 = arith.constant 0 : index
    %33 = vector.load %arg1[%32, %c0_17, %c0_18] : memref<8x4x32xf32, #tpu.memory_space<vmem>>, vector<1x4x32xf32>
    %34 = vector.shape_cast %33 : vector<1x4x32xf32> to vector<4x32xf32>
    %cst_19 = arith.constant dense<0.000000e+00> : vector<4x32xf32>
    %35 = tpu.matmul %27, %0, %cst_19 {dimension_numbers = #tpu.dot_dimension_numbers<[1], [0], [0], [1], [0, 0, 1, 1], [], []>, precision = #tpu.contract_precision<fp32>} : vector<4x32xf32>, vector<32x32xf32>, vector<4x32xf32> -> vector<4x32xf32>
    %36 = arith.addf %34, %35 : vector<4x32xf32>
    %37 = math.tanh %36 : vector<4x32xf32>
    %38 = arith.index_cast %c3_i32 : i32 to index
    %c0_20 = arith.constant 0 : index
    %c0_21 = arith.constant 0 : index
    %39 = vector.load %arg4[%38, %c0_20, %c0_21] : memref<8x4x32xf32, #tpu.memory_space<vmem>>, vector<1x4x32xf32>
    %40 = vector.shape_cast %39 : vector<1x4x32xf32> to vector<4x32xf32>
    %41 = vector.shape_cast %37 : vector<4x32xf32> to vector<1x4x32xf32>
    tpu.vector_store %arg4[%38, %c0_20, %c0_21], %41 {strides = array<i32>} : memref<8x4x32xf32, #tpu.memory_space<vmem>>, vector<1x4x32xf32>,
    %c4_i32 = arith.constant 4 : i32
    %42 = arith.index_cast %c4_i32 : i32 to index
    %c0_22 = arith.constant 0 : index
    %c0_23 = arith.constant 0 : index
    %43 = vector.load %arg1[%42, %c0_22, %c0_23] : memref<8x4x32xf32, #tpu.memory_space<vmem>>, vector<1x4x32xf32>
    %44 = vector.shape_cast %43 : vector<1x4x32xf32> to vector<4x32xf32>
    %cst_24 = arith.constant dense<0.000000e+00> : vector<4x32xf32>
    %45 = tpu.matmul %37, %0, %cst_24 {dimension_numbers = #tpu.dot_dimension_numbers<[1], [0], [0], [1], [0, 0, 1, 1], [], []>, precision = #tpu.contract_precision<fp32>} : vector<4x32xf32>, vector<32x32xf32>, vector<4x32xf32> -> vector<4x32xf32>
    %46 = arith.addf %44, %45 : vector<4x32xf32>
    %47 = math.tanh %46 : vector<4x32xf32>
    %48 = arith.index_cast %c4_i32 : i32 to index
    %c0_25 = arith.constant 0 : index
    %c0_26 = arith.constant 0 : index
    %49 = vector.load %arg4[%48, %c0_25, %c0_26] : memref<8x4x32xf32, #tpu.memory_space<vmem>>, vector<1x4x32xf32>
    %50 = vector.shape_cast %49 : vector<1x4x32xf32> to vector<4x32xf32>
    %51 = vector.shape_cast %47 : vector<4x32xf32> to vector<1x4x32xf32>
    tpu.vector_store %arg4[%48, %c0_25, %c0_26], %51 {strides = array<i32>} : memref<8x4x32xf32, #tpu.memory_space<vmem>>, vector<1x4x32xf32>,
    %c5_i32 = arith.constant 5 : i32
    %52 = arith.index_cast %c5_i32 : i32 to index
    %c0_27 = arith.constant 0 : index
    %c0_28 = arith.constant 0 : index
    %53 = vector.load %arg1[%52, %c0_27, %c0_28] : memref<8x4x32xf32, #tpu.memory_space<vmem>>, vector<1x4x32xf32>
    %54 = vector.shape_cast %53 : vector<1x4x32xf32> to vector<4x32xf32>
    %cst_29 = arith.constant dense<0.000000e+00> : vector<4x32xf32>
    %55 = tpu.matmul %47, %0, %cst_29 {dimension_numbers = #tpu.dot_dimension_numbers<[1], [0], [0], [1], [0, 0, 1, 1], [], []>, precision = #tpu.contract_precision<fp32>} : vector<4x32xf32>, vector<32x32xf32>, vector<4x32xf32> -> vector<4x32xf32>
    %56 = arith.addf %54, %55 : vector<4x32xf32>
    %57 = math.tanh %56 : vector<4x32xf32>
    %58 = arith.index_cast %c5_i32 : i32 to index
    %c0_30 = arith.constant 0 : index
    %c0_31 = arith.constant 0 : index
    %59 = vector.load %arg4[%58, %c0_30, %c0_31] : memref<8x4x32xf32, #tpu.memory_space<vmem>>, vector<1x4x32xf32>
    %60 = vector.shape_cast %59 : vector<1x4x32xf32> to vector<4x32xf32>
    %61 = vector.shape_cast %57 : vector<4x32xf32> to vector<1x4x32xf32>
    tpu.vector_store %arg4[%58, %c0_30, %c0_31], %61 {strides = array<i32>} : memref<8x4x32xf32, #tpu.memory_space<vmem>>, vector<1x4x32xf32>,
    %c6_i32 = arith.constant 6 : i32
    %62 = arith.index_cast %c6_i32 : i32 to index
    %c0_32 = arith.constant 0 : index
    %c0_33 = arith.constant 0 : index
    %63 = vector.load %arg1[%62, %c0_32, %c0_33] : memref<8x4x32xf32, #tpu.memory_space<vmem>>, vector<1x4x32xf32>
    %64 = vector.shape_cast %63 : vector<1x4x32xf32> to vector<4x32xf32>
    %cst_34 = arith.constant dense<0.000000e+00> : vector<4x32xf32>
    %65 = tpu.matmul %57, %0, %cst_34 {dimension_numbers = #tpu.dot_dimension_numbers<[1], [0], [0], [1], [0, 0, 1, 1], [], []>, precision = #tpu.contract_precision<fp32>} : vector<4x32xf32>, vector<32x32xf32>, vector<4x32xf32> -> vector<4x32xf32>
    %66 = arith.addf %64, %65 : vector<4x32xf32>
    %67 = math.tanh %66 : vector<4x32xf32>
    %68 = arith.index_cast %c6_i32 : i32 to index
    %c0_35 = arith.constant 0 : index
    %c0_36 = arith.constant 0 : index
    %69 = vector.load %arg4[%68, %c0_35, %c0_36] : memref<8x4x32xf32, #tpu.memory_space<vmem>>, vector<1x4x32xf32>
    %70 = vector.shape_cast %69 : vector<1x4x32xf32> to vector<4x32xf32>
    %71 = vector.shape_cast %67 : vector<4x32xf32> to vector<1x4x32xf32>
    tpu.vector_store %arg4[%68, %c0_35, %c0_36], %71 {strides = array<i32>} : memref<8x4x32xf32, #tpu.memory_space<vmem>>, vector<1x4x32xf32>,
    %c7_i32 = arith.constant 7 : i32
    %72 = arith.index_cast %c7_i32 : i32 to index
    %c0_37 = arith.constant 0 : index
    %c0_38 = arith.constant 0 : index
    %73 = vector.load %arg1[%72, %c0_37, %c0_38] : memref<8x4x32xf32, #tpu.memory_space<vmem>>, vector<1x4x32xf32>
    %74 = vector.shape_cast %73 : vector<1x4x32xf32> to vector<4x32xf32>
    %cst_39 = arith.constant dense<0.000000e+00> : vector<4x32xf32>
    %75 = tpu.matmul %67, %0, %cst_39 {dimension_numbers = #tpu.dot_dimension_numbers<[1], [0], [0], [1], [0, 0, 1, 1], [], []>, precision = #tpu.contract_precision<fp32>} : vector<4x32xf32>, vector<32x32xf32>, vector<4x32xf32> -> vector<4x32xf32>
    %76 = arith.addf %74, %75 : vector<4x32xf32>
    %77 = math.tanh %76 : vector<4x32xf32>
    %78 = arith.index_cast %c7_i32 : i32 to index
    %c0_40 = arith.constant 0 : index
    %c0_41 = arith.constant 0 : index
    %79 = vector.load %arg4[%78, %c0_40, %c0_41] : memref<8x4x32xf32, #tpu.memory_space<vmem>>, vector<1x4x32xf32>
    %80 = vector.shape_cast %79 : vector<1x4x32xf32> to vector<4x32xf32>
    %81 = vector.shape_cast %77 : vector<4x32xf32> to vector<1x4x32xf32>
    tpu.vector_store %arg4[%78, %c0_40, %c0_41], %81 {strides = array<i32>} : memref<8x4x32xf32, #tpu.memory_space<vmem>>, vector<1x4x32xf32>,
    %c8_i32 = arith.constant 8 : i32
    return
  }
  func.func @transform_0(%arg0: i32) -> (i32, i32, i32) {
    %c0_i32 = arith.constant 0 : i32
    %c0_i32_0 = arith.constant 0 : i32
    %c0_i32_1 = arith.constant 0 : i32
    return %c0_i32, %arg0, %c0_i32_0 : i32, i32, i32
  }
  func.func @transform_1(%arg0: i32) -> (i32, i32) {
    %c0_i32 = arith.constant 0 : i32
    %c0_i32_0 = arith.constant 0 : i32
    return %arg0, %c0_i32 : i32, i32
  }
  func.func @transform_2(%arg0: i32) -> (i32, i32) {
    %c0_i32 = arith.constant 0 : i32
    %c0_i32_0 = arith.constant 0 : i32
    %c0_i32_1 = arith.constant 0 : i32
    return %c0_i32, %c0_i32_0 : i32, i32
  }
  func.func @transform_3(%arg0: i32) -> (i32, i32, i32) {
    %c0_i32 = arith.constant 0 : i32
    %c0_i32_0 = arith.constant 0 : i32
    %c0_i32_1 = arith.constant 0 : i32
    return %c0_i32, %arg0, %c0_i32_0 : i32, i32, i32
  }
}

</mosaic_0001>

<llo_original>
// kernel: rnn_forward.1
$region0: #{rnn_forward.1}
  #allocation0 [shape = 'u32[]', space=smem, size = 0x4, offset = 0x4, fixed_abs, tag = 'smem constant byte address 0x4 - core index']
  #allocation1 [shape = 'u32[72,128]{1,0:T(1,128)}', space=vmem, size = 0x9000, scoped, tag = 'internal scratch']
  %s0 = inlined_call_operand.vmem [shape: f32[8,4,32], index: 0, kind: input, shape index: {}]
  %s1 = inlined_call_operand.vmem [shape: f32[4,32], index: 1, kind: input, shape index: {}]
  %s2 = inlined_call_operand.vmem [shape: f32[32,32], index: 2, kind: input, shape index: {}]
  %s3 = inlined_call_operand.vmem [shape: f32[8,4,32], index: 3, kind: output, shape index: {}]
  %s4 = sld [smem:[#allocation0]]
  $region22: #{rnn_forward.1} parent=0
    _
  %s6 = ssub.s32 1, %s4
  %s7 = scalar_select 0, %s6, %s4
  // Predicated region
  $region2: #{rnn_forward.1} parent=0 // pred_check
    _
  $region3: #{rnn_forward.1} parent=0 // pred_check_branch
    %9 = sbr.rel (0) target = $region5
  $region4: #{rnn_forward.1} parent=0 // pred_region
    _
  $region5: #{rnn_forward.1} parent=0 // pred_fallthru
    _
  // Predicated region
  $region6: #{rnn_forward.1} parent=0 // pred_check
    _
  $region7: #{rnn_forward.1} parent=0 // pred_check_branch
    %11 = sbr.rel (0) target = $region9
  $region8: #{rnn_forward.1} parent=0 // pred_region
    _
  $region9: #{rnn_forward.1} parent=0 // pred_fallthru
    _
  // Predicated region
  $region10: #{rnn_forward.1} parent=0 // pred_check
    _
  $region11: #{rnn_forward.1} parent=0 // pred_check_branch
    %13 = sbr.rel (0) target = $region13
  $region12: #{rnn_forward.1} parent=0 // pred_region
    _
  $region13: #{rnn_forward.1} parent=0 // pred_fallthru
    _
  %v14 = vld [vmem:[%s2] sm:$0xff]
  %v15 = vld [vmem:[%s2 + $0x8] sm:$0xff]
  %v16 = vld [vmem:[%s2 + $0x10] sm:$0xff]
  %v17 = vld [vmem:[%s2 + $0x18] sm:$0xff]
  %v18 = vld [vmem:[%s1] sm:$0xf]
  %v19 = vld [vmem:[%s0] sm:$0xf]
  %vm20 = vcmask 261120
  %v22 = vsel %vm20, %v18, 0
  %24 = vmatpush.msra.mxu0 0.0
  %25 = vmatpush.msra.mxu0 0.0
  %26 = vmatpush.msra.mxu0 0.0
  %27 = vmatpush.msra.mxu0 0.0
  %28 = vmatpush.msra.mxu0 0.0
  %29 = vmatpush.msra.mxu0 0.0
  %30 = vmatpush.msra.mxu0 0.0
  %31 = vmatpush.msra.mxu0 0.0
  %32 = vmatpush.msra.mxu0 0.0
  %33 = vmatpush.msra.mxu0 0.0
  %34 = vmatpush.msra.mxu0 0.0
  %35 = vmatpush.msra.mxu0 0.0
  %v36 = vand.u32 %v17, 4294901760
  %37 = vmatpush.msra.mxu0 %v36
  %v38 = vand.u32 %v16, 4294901760
  %39 = vmatpush.msra.mxu0 %v38
  %v40 = vand.u32 %v15, 4294901760
  %41 = vmatpush.msra.mxu0 %v40
  %v42 = vand.u32 %v14, 4294901760
  %43 = vmatpush.msra.mxu0 %v42
  %v44 = vand.u32 %v22, 4294901760
  %v45 = vsub.f32 %v22, %v44
  %v46 = vand.u32 %v45, 4294901760
  %v47 = vsub.f32 %v45, %v46
  %v48 = vand.u32 %v47, 4294901760
  %49 = vmatmul.f32.gmra.mxu0 %v48
  %v50 = vpop.f32.mrf.mxu0
  %v51 = vadd.f32 0.0, %v50
  %52 = vdwg.mxu0
  %53 = vmatpush.msra.mxu0 0.0
  %54 = vmatpush.msra.mxu0 0.0
  %55 = vmatpush.msra.mxu0 0.0
  %56 = vmatpush.msra.mxu0 0.0
  %57 = vmatpush.msra.mxu0 0.0
  %58 = vmatpush.msra.mxu0 0.0
  %59 = vmatpush.msra.mxu0 0.0
  %60 = vmatpush.msra.mxu0 0.0
  %61 = vmatpush.msra.mxu0 0.0
  %62 = vmatpush.msra.mxu0 0.0
  %63 = vmatpush.msra.mxu0 0.0
  %64 = vmatpush.msra.mxu0 0.0
  %v65 = vand.u32 %v17, 4294901760
  %v66 = vsub.f32 %v17, %v65
  %v67 = vand.u32 %v66, 4294901760
  %v68 = vsub.f32 %v66, %v67
  %v69 = vand.u32 %v68, 4294901760
  %70 = vmatpush.msra.mxu0 %v69
  %v71 = vand.u32 %v16, 4294901760
  %v72 = vsub.f32 %v16, %v71
  %v73 = vand.u32 %v72, 4294901760
  %v74 = vsub.f32 %v72, %v73
  %v75 = vand.u32 %v74, 4294901760
  %76 = vmatpush.msra.mxu0 %v75
  %v77 = vand.u32 %v15, 4294901760
  %v78 = vsub.f32 %v15, %v77
  %v79 = vand.u32 %v78, 4294901760
  %v80 = vsub.f32 %v78, %v79
  %v81 = vand.u32 %v80, 4294901760
  %82 = vmatpush.msra.mxu0 %v81
  %v83 = vand.u32 %v14, 4294901760
  %v84 = vsub.f32 %v14, %v83
  %v85 = vand.u32 %v84, 4294901760
  %v86 = vsub.f32 %v84, %v85
  %v87 = vand.u32 %v86, 4294901760
  %88 = vmatpush.msra.mxu0 %v87
  %v89 = vand.u32 %v22, 4294901760
  %90 = vmatmul.f32.gmra.mxu0 %v89
  %v91 = vpop.f32.mrf.mxu0
  %v92 = vadd.f32 %v51, %v91
  %93 = vdwg.mxu0
  %94 = vmatpush.msra.mxu0 0.0
  %95 = vmatpush.msra.mxu0 0.0
  %96 = vmatpush.msra.mxu0 0.0
  %97 = vmatpush.msra.mxu0 0.0
  %98 = vmatpush.msra.mxu0 0.0
  %99 = vmatpush.msra.mxu0 0.0
  %100 = vmatpush.msra.mxu0 0.0
  %101 = vmatpush.msra.mxu0 0.0
  %102 = vmatpush.msra.mxu0 0.0
  %103 = vmatpush.msra.mxu0 0.0
  %104 = vmatpush.msra.mxu0 0.0
  %105 = vmatpush.msra.mxu0 0.0
  %v106 = vand.u32 %v17, 4294901760
  %v107 = vsub.f32 %v17, %v106
  %108 = vmatpush.msra.mxu0 %v107
  %v109 = vand.u32 %v16, 4294901760
  %v110 = vsub.f32 %v16, %v109
  %111 = vmatpush.msra.mxu0 %v110
  %v112 = vand.u32 %v15, 4294901760
  %v113 = vsub.f32 %v15, %v112
  %114 = vmatpush.msra.mxu0 %v113
  %v115 = vand.u32 %v14, 4294901760
  %v116 = vsub.f32 %v14, %v115
  %117 = vmatpush.msra.mxu0 %v116
  %v118 = vand.u32 %v22, 4294901760
  %v119 = vsub.f32 %v22, %v118
  %120 = vmatmul.f32.gmra.mxu0 %v119
  %v121 = vpop.f32.mrf.mxu0
  %v122 = vadd.f32 %v92, %v121
  %123 = vdwg.mxu0
  %124 = vmatpush.msra.mxu0 0.0
  %125 = vmatpush.msra.mxu0 0.0
  %126 = vmatpush.msra.mxu0 0.0
  %127 = vmatpush.msra.mxu0 0.0
  %128 = vmatpush.msra.mxu0 0.0
  %129 = vmatpush.msra.mxu0 0.0
  %130 = vmatpush.msra.mxu0 0.0
  %131 = vmatpush.msra.mxu0 0.0
  %132 = vmatpush.msra.mxu0 0.0
  %133 = vmatpush.msra.mxu0 0.0
  %134 = vmatpush.msra.mxu0 0.0
  %135 = vmatpush.msra.mxu0 0.0
  %v136 = vand.u32 %v17, 4294901760
  %137 = vmatpush.msra.mxu0 %v136
  %v138 = vand.u32 %v16, 4294901760
  %139 = vmatpush.msra.mxu0 %v138
  %v140 = vand.u32 %v15, 4294901760
  %141 = vmatpush.msra.mxu0 %v140
  %v142 = vand.u32 %v14, 4294901760
  %143 = vmatpush.msra.mxu0 %v142
  %v144 = vand.u32 %v22, 4294901760
  %v145 = vsub.f32 %v22, %v144
  %v146 = vand.u32 %v145, 4294901760
  %147 = vmatmul.f32.gmra.mxu0 %v146
  %v148 = vpop.f32.mrf.mxu0
  %v149 = vadd.f32 %v122, %v148
  %150 = vdwg.mxu0
  %151 = vmatpush.msra.mxu0 0.0
  %152 = vmatpush.msra.mxu0 0.0
  %153 = vmatpush.msra.mxu0 0.0
  %154 = vmatpush.msra.mxu0 0.0
  %155 = vmatpush.msra.mxu0 0.0
  %156 = vmatpush.msra.mxu0 0.0
  %157 = vmatpush.msra.mxu0 0.0
  %158 = vmatpush.msra.mxu0 0.0
  %159 = vmatpush.msra.mxu0 0.0
  %160 = vmatpush.msra.mxu0 0.0
  %161 = vmatpush.msra.mxu0 0.0
  %162 = vmatpush.msra.mxu0 0.0
  %v163 = vand.u32 %v17, 4294901760
  %v164 = vsub.f32 %v17, %v163
  %v165 = vand.u32 %v164, 4294901760
  %166 = vmatpush.msra.mxu0 %v165
  %v167 = vand.u32 %v16, 4294901760
  %v168 = vsub.f32 %v16, %v167
  %v169 = vand.u32 %v168, 4294901760
  %170 = vmatpush.msra.mxu0 %v169
  %v171 = vand.u32 %v15, 4294901760
  %v172 = vsub.f32 %v15, %v171
  %v173 = vand.u32 %v172, 4294901760
  %174 = vmatpush.msra.mxu0 %v173
  %v175 = vand.u32 %v14, 4294901760
  %v176 = vsub.f32 %v14, %v175
  %v177 = vand.u32 %v176, 4294901760
  %178 = vmatpush.msra.mxu0 %v177
  %v179 = vand.u32 %v22, 4294901760
  %180 = vmatmul.f32.gmra.mxu0 %v179
  %v181 = vpop.f32.mrf.mxu0
  %v182 = vadd.f32 %v149, %v181
  %183 = vdwg.mxu0
  %184 = vmatpush.msra.mxu0 0.0
  %185 = vmatpush.msra.mxu0 0.0
  %186 = vmatpush.msra.mxu0 0.0
  %187 = vmatpush.msra.mxu0 0.0
  %188 = vmatpush.msra.mxu0 0.0
  %189 = vmatpush.msra.mxu0 0.0
  %190 = vmatpush.msra.mxu0 0.0
  %191 = vmatpush.msra.mxu0 0.0
  %192 = vmatpush.msra.mxu0 0.0
  %193 = vmatpush.msra.mxu0 0.0
  %194 = vmatpush.msra.mxu0 0.0
  %195 = vmatpush.msra.mxu0 0.0
  %v196 = vand.u32 %v17, 4294901760
  %197 = vmatpush.msra.mxu0 %v196
  %v198 = vand.u32 %v16, 4294901760
  %199 = vmatpush.msra.mxu0 %v198
  %v200 = vand.u32 %v15, 4294901760
  %201 = vmatpush.msra.mxu0 %v200
  %v202 = vand.u32 %v14, 4294901760
  %203 = vmatpush.msra.mxu0 %v202
  %v204 = vand.u32 %v22, 4294901760
  %205 = vmatmul.f32.gmra.mxu0 %v204
  %v206 = vpop.f32.mrf.mxu0
  %v207 = vadd.f32 %v182, %v206
  %208 = vdwg.mxu0
  %v209 = vadd.f32 %v19, %v207
  %v210 = vtanh.pop %v209
  %vm211 = vcmask 257024
  %212 = vst.msk [vmem:[%s3] sm:$0xf] %vm211, %v210
  %s213 = scalar_lea.vmem %s0, 4
  %v214 = vld [vmem:[%s213] sm:$0xf]
  %v216 = vsel %vm20, %v210, 0
  %218 = vmatpush.msra.mxu0 0.0
  %219 = vmatpush.msra.mxu0 0.0
  %220 = vmatpush.msra.mxu0 0.0
  %221 = vmatpush.msra.mxu0 0.0
  %222 = vmatpush.msra.mxu0 0.0
  %223 = vmatpush.msra.mxu0 0.0
  %224 = vmatpush.msra.mxu0 0.0
  %225 = vmatpush.msra.mxu0 0.0
  %226 = vmatpush.msra.mxu0 0.0
  %227 = vmatpush.msra.mxu0 0.0
  %228 = vmatpush.msra.mxu0 0.0
  %229 = vmatpush.msra.mxu0 0.0
  %v230 = vand.u32 %v17, 4294901760
  %231 = vmatpush.msra.mxu0 %v230
  %v232 = vand.u32 %v16, 4294901760
  %233 = vmatpush.msra.mxu0 %v232
  %v234 = vand.u32 %v15, 4294901760
  %235 = vmatpush.msra.mxu0 %v234
  %v236 = vand.u32 %v14, 4294901760
  %237 = vmatpush.msra.mxu0 %v236
  %v238 = vand.u32 %v216, 4294901760
  %v239 = vsub.f32 %v216, %v238
  %v240 = vand.u32 %v239, 4294901760
  %v241 = vsub.f32 %v239, %v240
  %v242 = vand.u32 %v241, 4294901760
  %243 = vmatmul.f32.gmra.mxu0 %v242
  %v244 = vpop.f32.mrf.mxu0
  %v245 = vadd.f32 0.0, %v244
  %246 = vdwg.mxu0
  %247 = vmatpush.msra.mxu0 0.0
  %248 = vmatpush.msra.mxu0 0.0
  %249 = vmatpush.msra.mxu0 0.0
  %250 = vmatpush.msra.mxu0 0.0
  %251 = vmatpush.msra.mxu0 0.0
  %252 = vmatpush.msra.mxu0 0.0
  %253 = vmatpush.msra.mxu0 0.0
  %254 = vmatpush.msra.mxu0 0.0
  %255 = vmatpush.msra.mxu0 0.0
  %256 = vmatpush.msra.mxu0 0.0
  %257 = vmatpush.msra.mxu0 0.0
  %258 = vmatpush.msra.mxu0 0.0
  %v259 = vand.u32 %v17, 4294901760
  %v260 = vsub.f32 %v17, %v259
  %v261 = vand.u32 %v260, 4294901760
  %v262 = vsub.f32 %v260, %v261
  %v263 = vand.u32 %v262, 4294901760
  %264 = vmatpush.msra.mxu0 %v263
  %v265 = vand.u32 %v16, 4294901760
  %v266 = vsub.f32 %v16, %v265
  %v267 = vand.u32 %v266, 4294901760
  %v268 = vsub.f32 %v266, %v267
  %v269 = vand.u32 %v268, 4294901760
  %270 = vmatpush.msra.mxu0 %v269
  %v271 = vand.u32 %v15, 4294901760
  %v272 = vsub.f32 %v15, %v271
  %v273 = vand.u32 %v272, 4294901760
  %v274 = vsub.f32 %v272, %v273
  %v275 = vand.u32 %v274, 4294901760
  %276 = vmatpush.msra.mxu0 %v275
  %v277 = vand.u32 %v14, 4294901760
  %v278 = vsub.f32 %v14, %v277
  %v279 = vand.u32 %v278, 4294901760
  %v280 = vsub.f32 %v278, %v279
  %v281 = vand.u32 %v280, 4294901760
  %282 = vmatpush.msra.mxu0 %v281
  %v283 = vand.u32 %v216, 4294901760
  %284 = vmatmul.f32.gmra.mxu0 %v283
  %v285 = vpop.f32.mrf.mxu0
  %v286 = vadd.f32 %v245, %v285
  %287 = vdwg.mxu0
  %288 = vmatpush.msra.mxu0 0.0
  %289 = vmatpush.msra.mxu0 0.0
  %290 = vmatpush.msra.mxu0 0.0
  %291 = vmatpush.msra.mxu0 0.0
  %292 = vmatpush.msra.mxu0 0.0
  %293 = vmatpush.msra.mxu0 0.0
  %294 = vmatpush.msra.mxu0 0.0
  %295 = vmatpush.msra.mxu0 0.0
  %296 = vmatpush.msra.mxu0 0.0
  %297 = vmatpush.msra.mxu0 0.0
  %298 = vmatpush.msra.mxu0 0.0
  %299 = vmatpush.msra.mxu0 0.0
  %v300 = vand.u32 %v17, 4294901760
  %v301 = vsub.f32 %v17, %v300
  %302 = vmatpush.msra.mxu0 %v301
  %v303 = vand.u32 %v16, 4294901760
  %v304 = vsub.f32 %v16, %v303
  %305 = vmatpush.msra.mxu0 %v304
  %v306 = vand.u32 %v15, 4294901760
  %v307 = vsub.f32 %v15, %v306
  %308 = vmatpush.msra.mxu0 %v307
  %v309 = vand.u32 %v14, 4294901760
  %v310 = vsub.f32 %v14, %v309
  %311 = vmatpush.msra.mxu0 %v310
  %v312 = vand.u32 %v216, 4294901760
  %v313 = vsub.f32 %v216, %v312
  %314 = vmatmul.f32.gmra.mxu0 %v313
  %v315 = vpop.f32.mrf.mxu0
  %v316 = vadd.f32 %v286, %v315
  %317 = vdwg.mxu0
  %318 = vmatpush.msra.mxu0 0.0
  %319 = vmatpush.msra.mxu0 0.0
  %320 = vmatpush.msra.mxu0 0.0
  %321 = vmatpush.msra.mxu0 0.0
  %322 = vmatpush.msra.mxu0 0.0
  %323 = vmatpush.msra.mxu0 0.0
  %324 = vmatpush.msra.mxu0 0.0
  %325 = vmatpush.msra.mxu0 0.0
  %326 = vmatpush.msra.mxu0 0.0
  %327 = vmatpush.msra.mxu0 0.0
  %328 = vmatpush.msra.mxu0 0.0
  %329 = vmatpush.msra.mxu0 0.0
  %v330 = vand.u32 %v17, 4294901760
  %331 = vmatpush.msra.mxu0 %v330
  %v332 = vand.u32 %v16, 4294901760
  %333 = vmatpush.msra.mxu0 %v332
  %v334 = vand.u32 %v15, 4294901760
  %335 = vmatpush.msra.mxu0 %v334
  %v336 = vand.u32 %v14, 4294901760
  %337 = vmatpush.msra.mxu0 %v336
  %v338 = vand.u32 %v216, 4294901760
  %v339 = vsub.f32 %v216, %v338
  %v340 = vand.u32 %v339, 4294901760
  %341 = vmatmul.f32.gmra.mxu0 %v340
  %v342 = vpop.f32.mrf.mxu0
  %v343 = vadd.f32 %v316, %v342
  %344 = vdwg.mxu0
  %345 = vmatpush.msra.mxu0 0.0
  %346 = vmatpush.msra.mxu0 0.0
  %347 = vmatpush.msra.mxu0 0.0
  %348 = vmatpush.msra.mxu0 0.0
  %349 = vmatpush.msra.mxu0 0.0
  %350 = vmatpush.msra.mxu0 0.0
  %351 = vmatpush.msra.mxu0 0.0
  %352 = vmatpush.msra.mxu0 0.0
  %353 = vmatpush.msra.mxu0 0.0
  %354 = vmatpush.msra.mxu0 0.0
  %355 = vmatpush.msra.mxu0 0.0
  %356 = vmatpush.msra.mxu0 0.0
  %v357 = vand.u32 %v17, 4294901760
  %v358 = vsub.f32 %v17, %v357
  %v359 = vand.u32 %v358, 4294901760
  %360 = vmatpush.msra.mxu0 %v359
  %v361 = vand.u32 %v16, 4294901760
  %v362 = vsub.f32 %v16, %v361
  %v363 = vand.u32 %v362, 4294901760
  %364 = vmatpush.msra.mxu0 %v363
  %v365 = vand.u32 %v15, 4294901760
  %v366 = vsub.f32 %v15, %v365
  %v367 = vand.u32 %v366, 4294901760
  %368 = vmatpush.msra.mxu0 %v367
  %v369 = vand.u32 %v14, 4294901760
  %v370 = vsub.f32 %v14, %v369
  %v371 = vand.u32 %v370, 4294901760
  %372 = vmatpush.msra.mxu0 %v371
  %v373 = vand.u32 %v216, 4294901760
  %374 = vmatmul.f32.gmra.mxu0 %v373
  %v375 = vpop.f32.mrf.mxu0
  %v376 = vadd.f32 %v343, %v375
  %377 = vdwg.mxu0
  %378 = vmatpush.msra.mxu0 0.0
  %379 = vmatpush.msra.mxu0 0.0
  %380 = vmatpush.msra.mxu0 0.0
  %381 = vmatpush.msra.mxu0 0.0
  %382 = vmatpush.msra.mxu0 0.0
  %383 = vmatpush.msra.mxu0 0.0
  %384 = vmatpush.msra.mxu0 0.0
  %385 = vmatpush.msra.mxu0 0.0
  %386 = vmatpush.msra.mxu0 0.0
  %387 = vmatpush.msra.mxu0 0.0
  %388 = vmatpush.msra.mxu0 0.0
  %389 = vmatpush.msra.mxu0 0.0
  %v390 = vand.u32 %v17, 4294901760
  %391 = vmatpush.msra.mxu0 %v390
  %v392 = vand.u32 %v16, 4294901760
  %393 = vmatpush.msra.mxu0 %v392
  %v394 = vand.u32 %v15, 4294901760
  %395 = vmatpush.msra.mxu0 %v394
  %v396 = vand.u32 %v14, 4294901760
  %397 = vmatpush.msra.mxu0 %v396
  %v398 = vand.u32 %v216, 4294901760
  %399 = vmatmul.f32.gmra.mxu0 %v398
  %v400 = vpop.f32.mrf.mxu0
  %v401 = vadd.f32 %v376, %v400
  %402 = vdwg.mxu0
  %v403 = vadd.f32 %v214, %v401
  %v404 = vtanh.pop %v403
  %s405 = scalar_lea.vmem %s3, 4
  %406 = vst.msk [vmem:[%s405] sm:$0xf] %vm211, %v404
  %s407 = scalar_lea.vmem %s0, 8
  %v408 = vld [vmem:[%s407] sm:$0xf]
  %v410 = vsel %vm20, %v404, 0
  %412 = vmatpush.msra.mxu0 0.0
  %413 = vmatpush.msra.mxu0 0.0
  %414 = vmatpush.msra.mxu0 0.0
  %415 = vmatpush.msra.mxu0 0.0
  %416 = vmatpush.msra.mxu0 0.0
  %417 = vmatpush.msra.mxu0 0.0
  %418 = vmatpush.msra.mxu0 0.0
  %419 = vmatpush.msra.mxu0 0.0
  %420 = vmatpush.msra.mxu0 0.0
  %421 = vmatpush.msra.mxu0 0.0
  %422 = vmatpush.msra.mxu0 0.0
  %423 = vmatpush.msra.mxu0 0.0
  %v424 = vand.u32 %v17, 4294901760
  %425 = vmatpush.msra.mxu0 %v424
  %v426 = vand.u32 %v16, 4294901760
  %427 = vmatpush.msra.mxu0 %v426
  %v428 = vand.u32 %v15, 4294901760
  %429 = vmatpush.msra.mxu0 %v428
  %v430 = vand.u32 %v14, 4294901760
  %431 = vmatpush.msra.mxu0 %v430
  %v432 = vand.u32 %v410, 4294901760
  %v433 = vsub.f32 %v410, %v432
  %v434 = vand.u32 %v433, 4294901760
  %v435 = vsub.f32 %v433, %v434
  %v436 = vand.u32 %v435, 4294901760
  %437 = vmatmul.f32.gmra.mxu0 %v436
  %v438 = vpop.f32.mrf.mxu0
  %v439 = vadd.f32 0.0, %v438
  %440 = vdwg.mxu0
  %441 = vmatpush.msra.mxu0 0.0
  %442 = vmatpush.msra.mxu0 0.0
  %443 = vmatpush.msra.mxu0 0.0
  %444 = vmatpush.msra.mxu0 0.0
  %445 = vmatpush.msra.mxu0 0.0
  %446 = vmatpush.msra.mxu0 0.0
  %447 = vmatpush.msra.mxu0 0.0
  %448 = vmatpush.msra.mxu0 0.0
  %449 = vmatpush.msra.mxu0 0.0
  %450 = vmatpush.msra.mxu0 0.0
  %451 = vmatpush.msra.mxu0 0.0
  %452 = vmatpush.msra.mxu0 0.0
  %v453 = vand.u32 %v17, 4294901760
  %v454 = vsub.f32 %v17, %v453
  %v455 = vand.u32 %v454, 4294901760
  %v456 = vsub.f32 %v454, %v455
  %v457 = vand.u32 %v456, 4294901760
  %458 = vmatpush.msra.mxu0 %v457
  %v459 = vand.u32 %v16, 4294901760
  %v460 = vsub.f32 %v16, %v459
  %v461 = vand.u32 %v460, 4294901760
  %v462 = vsub.f32 %v460, %v461
  %v463 = vand.u32 %v462, 4294901760
  %464 = vmatpush.msra.mxu0 %v463
  %v465 = vand.u32 %v15, 4294901760
  %v466 = vsub.f32 %v15, %v465
  %v467 = vand.u32 %v466, 4294901760
  %v468 = vsub.f32 %v466, %v467
  %v469 = vand.u32 %v468, 4294901760
  %470 = vmatpush.msra.mxu0 %v469
  %v471 = vand.u32 %v14, 4294901760
  %v472 = vsub.f32 %v14, %v471
  %v473 = vand.u32 %v472, 4294901760
  %v474 = vsub.f32 %v472, %v473
  %v475 = vand.u32 %v474, 4294901760
  %476 = vmatpush.msra.mxu0 %v475
  %v477 = vand.u32 %v410, 4294901760
  %478 = vmatmul.f32.gmra.mxu0 %v477
  %v479 = vpop.f32.mrf.mxu0
  %v480 = vadd.f32 %v439, %v479
  %481 = vdwg.mxu0
  %482 = vmatpush.msra.mxu0 0.0
  %483 = vmatpush.msra.mxu0 0.0
  %484 = vmatpush.msra.mxu0 0.0
  %485 = vmatpush.msra.mxu0 0.0
  %486 = vmatpush.msra.mxu0 0.0
  %487 = vmatpush.msra.mxu0 0.0
  %488 = vmatpush.msra.mxu0 0.0
  %489 = vmatpush.msra.mxu0 0.0
  %490 = vmatpush.msra.mxu0 0.0
  %491 = vmatpush.msra.mxu0 0.0
  %492 = vmatpush.msra.mxu0 0.0
  %493 = vmatpush.msra.mxu0 0.0
  %v494 = vand.u32 %v17, 4294901760
  %v495 = vsub.f32 %v17, %v494
  %496 = vmatpush.msra.mxu0 %v495
  %v497 = vand.u32 %v16, 4294901760
  %v498 = vsub.f32 %v16, %v497
  %499 = vmatpush.msra.mxu0 %v498
  %v500 = vand.u32 %v15, 4294901760
  %v501 = vsub.f32 %v15, %v500
  %502 = vmatpush.msra.mxu0 %v501
  %v503 = vand.u32 %v14, 4294901760
  %v504 = vsub.f32 %v14, %v503
  %505 = vmatpush.msra.mxu0 %v504
  %v506 = vand.u32 %v410, 4294901760
  %v507 = vsub.f32 %v410, %v506
  %508 = vmatmul.f32.gmra.mxu0 %v507
  %v509 = vpop.f32.mrf.mxu0
  %v510 = vadd.f32 %v480, %v509
  %511 = vdwg.mxu0
  %512 = vmatpush.msra.mxu0 0.0
  %513 = vmatpush.msra.mxu0 0.0
  %514 = vmatpush.msra.mxu0 0.0
  %515 = vmatpush.msra.mxu0 0.0
  %516 = vmatpush.msra.mxu0 0.0
  %517 = vmatpush.msra.mxu0 0.0
  %518 = vmatpush.msra.mxu0 0.0
  %519 = vmatpush.msra.mxu0 0.0
  %520 = vmatpush.msra.mxu0 0.0
  %521 = vmatpush.msra.mxu0 0.0
  %522 = vmatpush.msra.mxu0 0.0
  %523 = vmatpush.msra.mxu0 0.0
  %v524 = vand.u32 %v17, 4294901760
  %525 = vmatpush.msra.mxu0 %v524
  %v526 = vand.u32 %v16, 4294901760
  %527 = vmatpush.msra.mxu0 %v526
  %v528 = vand.u32 %v15, 4294901760
  %529 = vmatpush.msra.mxu0 %v528
  %v530 = vand.u32 %v14, 4294901760
  %531 = vmatpush.msra.mxu0 %v530
  %v532 = vand.u32 %v410, 4294901760
  %v533 = vsub.f32 %v410, %v532
  %v534 = vand.u32 %v533, 4294901760
  %535 = vmatmul.f32.gmra.mxu0 %v534
  %v536 = vpop.f32.mrf.mxu0
  %v537 = vadd.f32 %v510, %v536
  %538 = vdwg.mxu0
  %539 = vmatpush.msra.mxu0 0.0
  %540 = vmatpush.msra.mxu0 0.0
  %541 = vmatpush.msra.mxu0 0.0
  %542 = vmatpush.msra.mxu0 0.0
  %543 = vmatpush.msra.mxu0 0.0
  %544 = vmatpush.msra.mxu0 0.0
  %545 = vmatpush.msra.mxu0 0.0
  %546 = vmatpush.msra.mxu0 0.0
  %547 = vmatpush.msra.mxu0 0.0
  %548 = vmatpush.msra.mxu0 0.0
  %549 = vmatpush.msra.mxu0 0.0
  %550 = vmatpush.msra.mxu0 0.0
  %v551 = vand.u32 %v17, 4294901760
  %v552 = vsub.f32 %v17, %v551
  %v553 = vand.u32 %v552, 4294901760
  %554 = vmatpush.msra.mxu0 %v553
  %v555 = vand.u32 %v16, 4294901760
  %v556 = vsub.f32 %v16, %v555
  %v557 = vand.u32 %v556, 4294901760
  %558 = vmatpush.msra.mxu0 %v557
  %v559 = vand.u32 %v15, 4294901760
  %v560 = vsub.f32 %v15, %v559
  %v561 = vand.u32 %v560, 4294901760
  %562 = vmatpush.msra.mxu0 %v561
  %v563 = vand.u32 %v14, 4294901760
  %v564 = vsub.f32 %v14, %v563
  %v565 = vand.u32 %v564, 4294901760
  %566 = vmatpush.msra.mxu0 %v565
  %v567 = vand.u32 %v410, 4294901760
  %568 = vmatmul.f32.gmra.mxu0 %v567
  %v569 = vpop.f32.mrf.mxu0
  %v570 = vadd.f32 %v537, %v569
  %571 = vdwg.mxu0
  %572 = vmatpush.msra.mxu0 0.0
  %573 = vmatpush.msra.mxu0 0.0
  %574 = vmatpush.msra.mxu0 0.0
  %575 = vmatpush.msra.mxu0 0.0
  %576 = vmatpush.msra.mxu0 0.0
  %577 = vmatpush.msra.mxu0 0.0
  %578 = vmatpush.msra.mxu0 0.0
  %579 = vmatpush.msra.mxu0 0.0
  %580 = vmatpush.msra.mxu0 0.0
  %581 = vmatpush.msra.mxu0 0.0
  %582 = vmatpush.msra.mxu0 0.0
  %583 = vmatpush.msra.mxu0 0.0
  %v584 = vand.u32 %v17, 4294901760
  %585 = vmatpush.msra.mxu0 %v584
  %v586 = vand.u32 %v16, 4294901760
  %587 = vmatpush.msra.mxu0 %v586
  %v588 = vand.u32 %v15, 4294901760
  %589 = vmatpush.msra.mxu0 %v588
  %v590 = vand.u32 %v14, 4294901760
  %591 = vmatpush.msra.mxu0 %v590
  %v592 = vand.u32 %v410, 4294901760
  %593 = vmatmul.f32.gmra.mxu0 %v592
  %v594 = vpop.f32.mrf.mxu0
  %v595 = vadd.f32 %v570, %v594
  %596 = vdwg.mxu0
  %v597 = vadd.f32 %v408, %v595
  %v598 = vtanh.pop %v597
  %s599 = scalar_lea.vmem %s3, 8
  %600 = vst.msk [vmem:[%s599] sm:$0xf] %vm211, %v598
  %s601 = scalar_lea.vmem %s0, 12
  %v602 = vld [vmem:[%s601] sm:$0xf]
  %v604 = vsel %vm20, %v598, 0
  %606 = vmatpush.msra.mxu0 0.0
  %607 = vmatpush.msra.mxu0 0.0
  %608 = vmatpush.msra.mxu0 0.0
  %609 = vmatpush.msra.mxu0 0.0
  %610 = vmatpush.msra.mxu0 0.0
  %611 = vmatpush.msra.mxu0 0.0
  %612 = vmatpush.msra.mxu0 0.0
  %613 = vmatpush.msra.mxu0 0.0
  %614 = vmatpush.msra.mxu0 0.0
  %615 = vmatpush.msra.mxu0 0.0
  %616 = vmatpush.msra.mxu0 0.0
  %617 = vmatpush.msra.mxu0 0.0
  %v618 = vand.u32 %v17, 4294901760
  %619 = vmatpush.msra.mxu0 %v618
  %v620 = vand.u32 %v16, 4294901760
  %621 = vmatpush.msra.mxu0 %v620
  %v622 = vand.u32 %v15, 4294901760
  %623 = vmatpush.msra.mxu0 %v622
  %v624 = vand.u32 %v14, 4294901760
  %625 = vmatpush.msra.mxu0 %v624
  %v626 = vand.u32 %v604, 4294901760
  %v627 = vsub.f32 %v604, %v626
  %v628 = vand.u32 %v627, 4294901760
  %v629 = vsub.f32 %v627, %v628
  %v630 = vand.u32 %v629, 4294901760
  %631 = vmatmul.f32.gmra.mxu0 %v630
  %v632 = vpop.f32.mrf.mxu0
  %v633 = vadd.f32 0.0, %v632
  %634 = vdwg.mxu0
  %635 = vmatpush.msra.mxu0 0.0
  %636 = vmatpush.msra.mxu0 0.0
  %637 = vmatpush.msra.mxu0 0.0
  %638 = vmatpush.msra.mxu0 0.0
  %639 = vmatpush.msra.mxu0 0.0
  %640 = vmatpush.msra.mxu0 0.0
  %641 = vmatpush.msra.mxu0 0.0
  %642 = vmatpush.msra.mxu0 0.0
  %643 = vmatpush.msra.mxu0 0.0
  %644 = vmatpush.msra.mxu0 0.0
  %645 = vmatpush.msra.mxu0 0.0
  %646 = vmatpush.msra.mxu0 0.0
  %v647 = vand.u32 %v17, 4294901760
  %v648 = vsub.f32 %v17, %v647
  %v649 = vand.u32 %v648, 4294901760
  %v650 = vsub.f32 %v648, %v649
  %v651 = vand.u32 %v650, 4294901760
  %652 = vmatpush.msra.mxu0 %v651
  %v653 = vand.u32 %v16, 4294901760
  %v654 = vsub.f32 %v16, %v653
  %v655 = vand.u32 %v654, 4294901760
  %v656 = vsub.f32 %v654, %v655
  %v657 = vand.u32 %v656, 4294901760
  %658 = vmatpush.msra.mxu0 %v657
  %v659 = vand.u32 %v15, 4294901760
  %v660 = vsub.f32 %v15, %v659
  %v661 = vand.u32 %v660, 4294901760
  %v662 = vsub.f32 %v660, %v661
  %v663 = vand.u32 %v662, 4294901760
  %664 = vmatpush.msra.mxu0 %v663
  %v665 = vand.u32 %v14, 4294901760
  %v666 = vsub.f32 %v14, %v665
  %v667 = vand.u32 %v666, 4294901760
  %v668 = vsub.f32 %v666, %v667
  %v669 = vand.u32 %v668, 4294901760
  %670 = vmatpush.msra.mxu0 %v669
  %v671 = vand.u32 %v604, 4294901760
  %672 = vmatmul.f32.gmra.mxu0 %v671
  %v673 = vpop.f32.mrf.mxu0
  %v674 = vadd.f32 %v633, %v673
  %675 = vdwg.mxu0
  %676 = vmatpush.msra.mxu0 0.0
  %677 = vmatpush.msra.mxu0 0.0
  %678 = vmatpush.msra.mxu0 0.0
  %679 = vmatpush.msra.mxu0 0.0
  %680 = vmatpush.msra.mxu0 0.0
  %681 = vmatpush.msra.mxu0 0.0
  %682 = vmatpush.msra.mxu0 0.0
  %683 = vmatpush.msra.mxu0 0.0
  %684 = vmatpush.msra.mxu0 0.0
  %685 = vmatpush.msra.mxu0 0.0
  %686 = vmatpush.msra.mxu0 0.0
  %687 = vmatpush.msra.mxu0 0.0
  %v688 = vand.u32 %v17, 4294901760
  %v689 = vsub.f32 %v17, %v688
  %690 = vmatpush.msra.mxu0 %v689
  %v691 = vand.u32 %v16, 4294901760
  %v692 = vsub.f32 %v16, %v691
  %693 = vmatpush.msra.mxu0 %v692
  %v694 = vand.u32 %v15, 4294901760
  %v695 = vsub.f32 %v15, %v694
  %696 = vmatpush.msra.mxu0 %v695
  %v697 = vand.u32 %v14, 4294901760
  %v698 = vsub.f32 %v14, %v697
  %699 = vmatpush.msra.mxu0 %v698
  %v700 = vand.u32 %v604, 4294901760
  %v701 = vsub.f32 %v604, %v700
  %702 = vmatmul.f32.gmra.mxu0 %v701
  %v703 = vpop.f32.mrf.mxu0
  %v704 = vadd.f32 %v674, %v703
  %705 = vdwg.mxu0
  %706 = vmatpush.msra.mxu0 0.0
  %707 = vmatpush.msra.mxu0 0.0
  %708 = vmatpush.msra.mxu0 0.0
  %709 = vmatpush.msra.mxu0 0.0
  %710 = vmatpush.msra.mxu0 0.0
  %711 = vmatpush.msra.mxu0 0.0
  %712 = vmatpush.msra.mxu0 0.0
  %713 = vmatpush.msra.mxu0 0.0
  %714 = vmatpush.msra.mxu0 0.0
  %715 = vmatpush.msra.mxu0 0.0
  %716 = vmatpush.msra.mxu0 0.0
  %717 = vmatpush.msra.mxu0 0.0
  %v718 = vand.u32 %v17, 4294901760
  %719 = vmatpush.msra.mxu0 %v718
  %v720 = vand.u32 %v16, 4294901760
  %721 = vmatpush.msra.mxu0 %v720
  %v722 = vand.u32 %v15, 4294901760
  %723 = vmatpush.msra.mxu0 %v722
  %v724 = vand.u32 %v14, 4294901760
  %725 = vmatpush.msra.mxu0 %v724
  %v726 = vand.u32 %v604, 4294901760
  %v727 = vsub.f32 %v604, %v726
  %v728 = vand.u32 %v727, 4294901760
  %729 = vmatmul.f32.gmra.mxu0 %v728
  %v730 = vpop.f32.mrf.mxu0
  %v731 = vadd.f32 %v704, %v730
  %732 = vdwg.mxu0
  %733 = vmatpush.msra.mxu0 0.0
  %734 = vmatpush.msra.mxu0 0.0
  %735 = vmatpush.msra.mxu0 0.0
  %736 = vmatpush.msra.mxu0 0.0
  %737 = vmatpush.msra.mxu0 0.0
  %738 = vmatpush.msra.mxu0 0.0
  %739 = vmatpush.msra.mxu0 0.0
  %740 = vmatpush.msra.mxu0 0.0
  %741 = vmatpush.msra.mxu0 0.0
  %742 = vmatpush.msra.mxu0 0.0
  %743 = vmatpush.msra.mxu0 0.0
  %744 = vmatpush.msra.mxu0 0.0
  %v745 = vand.u32 %v17, 4294901760
  %v746 = vsub.f32 %v17, %v745
  %v747 = vand.u32 %v746, 4294901760
  %748 = vmatpush.msra.mxu0 %v747
  %v749 = vand.u32 %v16, 4294901760
  %v750 = vsub.f32 %v16, %v749
  %v751 = vand.u32 %v750, 4294901760
  %752 = vmatpush.msra.mxu0 %v751
  %v753 = vand.u32 %v15, 4294901760
  %v754 = vsub.f32 %v15, %v753
  %v755 = vand.u32 %v754, 4294901760
  %756 = vmatpush.msra.mxu0 %v755
  %v757 = vand.u32 %v14, 4294901760
  %v758 = vsub.f32 %v14, %v757
  %v759 = vand.u32 %v758, 4294901760
  %760 = vmatpush.msra.mxu0 %v759
  %v761 = vand.u32 %v604, 4294901760
  %762 = vmatmul.f32.gmra.mxu0 %v761
  %v763 = vpop.f32.mrf.mxu0
  %v764 = vadd.f32 %v731, %v763
  %765 = vdwg.mxu0
  %766 = vmatpush.msra.mxu0 0.0
  %767 = vmatpush.msra.mxu0 0.0
  %768 = vmatpush.msra.mxu0 0.0
  %769 = vmatpush.msra.mxu0 0.0
  %770 = vmatpush.msra.mxu0 0.0
  %771 = vmatpush.msra.mxu0 0.0
  %772 = vmatpush.msra.mxu0 0.0
  %773 = vmatpush.msra.mxu0 0.0
  %774 = vmatpush.msra.mxu0 0.0
  %775 = vmatpush.msra.mxu0 0.0
  %776 = vmatpush.msra.mxu0 0.0
  %777 = vmatpush.msra.mxu0 0.0
  %v778 = vand.u32 %v17, 4294901760
  %779 = vmatpush.msra.mxu0 %v778
  %v780 = vand.u32 %v16, 4294901760
  %781 = vmatpush.msra.mxu0 %v780
  %v782 = vand.u32 %v15, 4294901760
  %783 = vmatpush.msra.mxu0 %v782
  %v784 = vand.u32 %v14, 4294901760
  %785 = vmatpush.msra.mxu0 %v784
  %v786 = vand.u32 %v604, 4294901760
  %787 = vmatmul.f32.gmra.mxu0 %v786
  %v788 = vpop.f32.mrf.mxu0
  %v789 = vadd.f32 %v764, %v788
  %790 = vdwg.mxu0
  %v791 = vadd.f32 %v602, %v789
  %v792 = vtanh.pop %v791
  %s793 = scalar_lea.vmem %s3, 12
  %794 = vst.msk [vmem:[%s793] sm:$0xf] %vm211, %v792
  %s795 = scalar_lea.vmem %s0, 16
  %v796 = vld [vmem:[%s795] sm:$0xf]
  %v798 = vsel %vm20, %v792, 0
  %800 = vmatpush.msra.mxu0 0.0
  %801 = vmatpush.msra.mxu0 0.0
  %802 = vmatpush.msra.mxu0 0.0
  %803 = vmatpush.msra.mxu0 0.0
  %804 = vmatpush.msra.mxu0 0.0
  %805 = vmatpush.msra.mxu0 0.0
  %806 = vmatpush.msra.mxu0 0.0
  %807 = vmatpush.msra.mxu0 0.0
  %808 = vmatpush.msra.mxu0 0.0
  %809 = vmatpush.msra.mxu0 0.0
  %810 = vmatpush.msra.mxu0 0.0
  %811 = vmatpush.msra.mxu0 0.0
  %v812 = vand.u32 %v17, 4294901760
  %813 = vmatpush.msra.mxu0 %v812
  %v814 = vand.u32 %v16, 4294901760
  %815 = vmatpush.msra.mxu0 %v814
  %v816 = vand.u32 %v15, 4294901760
  %817 = vmatpush.msra.mxu0 %v816
  %v818 = vand.u32 %v14, 4294901760
  %819 = vmatpush.msra.mxu0 %v818
  %v820 = vand.u32 %v798, 4294901760
  %v821 = vsub.f32 %v798, %v820
  %v822 = vand.u32 %v821, 4294901760
  %v823 = vsub.f32 %v821, %v822
  %v824 = vand.u32 %v823, 4294901760
  %825 = vmatmul.f32.gmra.mxu0 %v824
  %v826 = vpop.f32.mrf.mxu0
  %v827 = vadd.f32 0.0, %v826
  %828 = vdwg.mxu0
  %829 = vmatpush.msra.mxu0 0.0
  %830 = vmatpush.msra.mxu0 0.0
  %831 = vmatpush.msra.mxu0 0.0
  %832 = vmatpush.msra.mxu0 0.0
  %833 = vmatpush.msra.mxu0 0.0
  %834 = vmatpush.msra.mxu0 0.0
  %835 = vmatpush.msra.mxu0 0.0
  %836 = vmatpush.msra.mxu0 0.0
  %837 = vmatpush.msra.mxu0 0.0
  %838 = vmatpush.msra.mxu0 0.0
  %839 = vmatpush.msra.mxu0 0.0
  %840 = vmatpush.msra.mxu0 0.0
  %v841 = vand.u32 %v17, 4294901760
  %v842 = vsub.f32 %v17, %v841
  %v843 = vand.u32 %v842, 4294901760
  %v844 = vsub.f32 %v842, %v843
  %v845 = vand.u32 %v844, 4294901760
  %846 = vmatpush.msra.mxu0 %v845
  %v847 = vand.u32 %v16, 4294901760
  %v848 = vsub.f32 %v16, %v847
  %v849 = vand.u32 %v848, 4294901760
  %v850 = vsub.f32 %v848, %v849
  %v851 = vand.u32 %v850, 4294901760
  %852 = vmatpush.msra.mxu0 %v851
  %v853 = vand.u32 %v15, 4294901760
  %v854 = vsub.f32 %v15, %v853
  %v855 = vand.u32 %v854, 4294901760
  %v856 = vsub.f32 %v854, %v855
  %v857 = vand.u32 %v856, 4294901760
  %858 = vmatpush.msra.mxu0 %v857
  %v859 = vand.u32 %v14, 4294901760
  %v860 = vsub.f32 %v14, %v859
  %v861 = vand.u32 %v860, 4294901760
  %v862 = vsub.f32 %v860, %v861
  %v863 = vand.u32 %v862, 4294901760
  %864 = vmatpush.msra.mxu0 %v863
  %v865 = vand.u32 %v798, 4294901760
  %866 = vmatmul.f32.gmra.mxu0 %v865
  %v867 = vpop.f32.mrf.mxu0
  %v868 = vadd.f32 %v827, %v867
  %869 = vdwg.mxu0
  %870 = vmatpush.msra.mxu0 0.0
  %871 = vmatpush.msra.mxu0 0.0
  %872 = vmatpush.msra.mxu0 0.0
  %873 = vmatpush.msra.mxu0 0.0
  %874 = vmatpush.msra.mxu0 0.0
  %875 = vmatpush.msra.mxu0 0.0
  %876 = vmatpush.msra.mxu0 0.0
  %877 = vmatpush.msra.mxu0 0.0
  %878 = vmatpush.msra.mxu0 0.0
  %879 = vmatpush.msra.mxu0 0.0
  %880 = vmatpush.msra.mxu0 0.0
  %881 = vmatpush.msra.mxu0 0.0
  %v882 = vand.u32 %v17, 4294901760
  %v883 = vsub.f32 %v17, %v882
  %884 = vmatpush.msra.mxu0 %v883
  %v885 = vand.u32 %v16, 4294901760
  %v886 = vsub.f32 %v16, %v885
  %887 = vmatpush.msra.mxu0 %v886
  %v888 = vand.u32 %v15, 4294901760
  %v889 = vsub.f32 %v15, %v888
  %890 = vmatpush.msra.mxu0 %v889
  %v891 = vand.u32 %v14, 4294901760
  %v892 = vsub.f32 %v14, %v891
  %893 = vmatpush.msra.mxu0 %v892
  %v894 = vand.u32 %v798, 4294901760
  %v895 = vsub.f32 %v798, %v894
  %896 = vmatmul.f32.gmra.mxu0 %v895
  %v897 = vpop.f32.mrf.mxu0
  %v898 = vadd.f32 %v868, %v897
  %899 = vdwg.mxu0
  %900 = vmatpush.msra.mxu0 0.0
  %901 = vmatpush.msra.mxu0 0.0
  %902 = vmatpush.msra.mxu0 0.0
  %903 = vmatpush.msra.mxu0 0.0
  %904 = vmatpush.msra.mxu0 0.0
  %905 = vmatpush.msra.mxu0 0.0
  %906 = vmatpush.msra.mxu0 0.0
  %907 = vmatpush.msra.mxu0 0.0
  %908 = vmatpush.msra.mxu0 0.0
  %909 = vmatpush.msra.mxu0 0.0
  %910 = vmatpush.msra.mxu0 0.0
  %911 = vmatpush.msra.mxu0 0.0
  %v912 = vand.u32 %v17, 4294901760
  %913 = vmatpush.msra.mxu0 %v912
  %v914 = vand.u32 %v16, 4294901760
  %915 = vmatpush.msra.mxu0 %v914
  %v916 = vand.u32 %v15, 4294901760
  %917 = vmatpush.msra.mxu0 %v916
  %v918 = vand.u32 %v14, 4294901760
  %919 = vmatpush.msra.mxu0 %v918
  %v920 = vand.u32 %v798, 4294901760
  %v921 = vsub.f32 %v798, %v920
  %v922 = vand.u32 %v921, 4294901760
  %923 = vmatmul.f32.gmra.mxu0 %v922
  %v924 = vpop.f32.mrf.mxu0
  %v925 = vadd.f32 %v898, %v924
  %926 = vdwg.mxu0
  %927 = vmatpush.msra.mxu0 0.0
  %928 = vmatpush.msra.mxu0 0.0
  %929 = vmatpush.msra.mxu0 0.0
  %930 = vmatpush.msra.mxu0 0.0
  %931 = vmatpush.msra.mxu0 0.0
  %932 = vmatpush.msra.mxu0 0.0
  %933 = vmatpush.msra.mxu0 0.0
  %934 = vmatpush.msra.mxu0 0.0
  %935 = vmatpush.msra.mxu0 0.0
  %936 = vmatpush.msra.mxu0 0.0
  %937 = vmatpush.msra.mxu0 0.0
  %938 = vmatpush.msra.mxu0 0.0
  %v939 = vand.u32 %v17, 4294901760
  %v940 = vsub.f32 %v17, %v939
  %v941 = vand.u32 %v940, 4294901760
  %942 = vmatpush.msra.mxu0 %v941
  %v943 = vand.u32 %v16, 4294901760
  %v944 = vsub.f32 %v16, %v943
  %v945 = vand.u32 %v944, 4294901760
  %946 = vmatpush.msra.mxu0 %v945
  %v947 = vand.u32 %v15, 4294901760
  %v948 = vsub.f32 %v15, %v947
  %v949 = vand.u32 %v948, 4294901760
  %950 = vmatpush.msra.mxu0 %v949
  %v951 = vand.u32 %v14, 4294901760
  %v952 = vsub.f32 %v14, %v951
  %v953 = vand.u32 %v952, 4294901760
  %954 = vmatpush.msra.mxu0 %v953
  %v955 = vand.u32 %v798, 4294901760
  %956 = vmatmul.f32.gmra.mxu0 %v955
  %v957 = vpop.f32.mrf.mxu0
  %v958 = vadd.f32 %v925, %v957
  %959 = vdwg.mxu0
  %960 = vmatpush.msra.mxu0 0.0
  %961 = vmatpush.msra.mxu0 0.0
  %962 = vmatpush.msra.mxu0 0.0
  %963 = vmatpush.msra.mxu0 0.0
  %964 = vmatpush.msra.mxu0 0.0
  %965 = vmatpush.msra.mxu0 0.0
  %966 = vmatpush.msra.mxu0 0.0
  %967 = vmatpush.msra.mxu0 0.0
  %968 = vmatpush.msra.mxu0 0.0
  %969 = vmatpush.msra.mxu0 0.0
  %970 = vmatpush.msra.mxu0 0.0
  %971 = vmatpush.msra.mxu0 0.0
  %v972 = vand.u32 %v17, 4294901760
  %973 = vmatpush.msra.mxu0 %v972
  %v974 = vand.u32 %v16, 4294901760
  %975 = vmatpush.msra.mxu0 %v974
  %v976 = vand.u32 %v15, 4294901760
  %977 = vmatpush.msra.mxu0 %v976
  %v978 = vand.u32 %v14, 4294901760
  %979 = vmatpush.msra.mxu0 %v978
  %v980 = vand.u32 %v798, 4294901760
  %981 = vmatmul.f32.gmra.mxu0 %v980
  %v982 = vpop.f32.mrf.mxu0
  %v983 = vadd.f32 %v958, %v982
  %984 = vdwg.mxu0
  %v985 = vadd.f32 %v796, %v983
  %v986 = vtanh.pop %v985
  %s987 = scalar_lea.vmem %s3, 16
  %988 = vst.msk [vmem:[%s987] sm:$0xf] %vm211, %v986
  %s989 = scalar_lea.vmem %s0, 20
  %v990 = vld [vmem:[%s989] sm:$0xf]
  %v992 = vsel %vm20, %v986, 0
  %994 = vmatpush.msra.mxu0 0.0
  %995 = vmatpush.msra.mxu0 0.0
  %996 = vmatpush.msra.mxu0 0.0
  %997 = vmatpush.msra.mxu0 0.0
  %998 = vmatpush.msra.mxu0 0.0
  %999 = vmatpush.msra.mxu0 0.0
  %1000 = vmatpush.msra.mxu0 0.0
  %1001 = vmatpush.msra.mxu0 0.0
  %1002 = vmatpush.msra.mxu0 0.0
  %1003 = vmatpush.msra.mxu0 0.0
  %1004 = vmatpush.msra.mxu0 0.0
  %1005 = vmatpush.msra.mxu0 0.0
  %v1006 = vand.u32 %v17, 4294901760
  %1007 = vmatpush.msra.mxu0 %v1006
  %v1008 = vand.u32 %v16, 4294901760
  %1009 = vmatpush.msra.mxu0 %v1008
  %v1010 = vand.u32 %v15, 4294901760
  %1011 = vmatpush.msra.mxu0 %v1010
  %v1012 = vand.u32 %v14, 4294901760
  %1013 = vmatpush.msra.mxu0 %v1012
  %v1014 = vand.u32 %v992, 4294901760
  %v1015 = vsub.f32 %v992, %v1014
  %v1016 = vand.u32 %v1015, 4294901760
  %v1017 = vsub.f32 %v1015, %v1016
  %v1018 = vand.u32 %v1017, 4294901760
  %1019 = vmatmul.f32.gmra.mxu0 %v1018
  %v1020 = vpop.f32.mrf.mxu0
  %v1021 = vadd.f32 0.0, %v1020
  %1022 = vdwg.mxu0
  %1023 = vmatpush.msra.mxu0 0.0
  %1024 = vmatpush.msra.mxu0 0.0
  %1025 = vmatpush.msra.mxu0 0.0
  %1026 = vmatpush.msra.mxu0 0.0
  %1027 = vmatpush.msra.mxu0 0.0
  %1028 = vmatpush.msra.mxu0 0.0
  %1029 = vmatpush.msra.mxu0 0.0
  %1030 = vmatpush.msra.mxu0 0.0
  %1031 = vmatpush.msra.mxu0 0.0
  %1032 = vmatpush.msra.mxu0 0.0
  %1033 = vmatpush.msra.mxu0 0.0
  %1034 = vmatpush.msra.mxu0 0.0
  %v1035 = vand.u32 %v17, 4294901760
  %v1036 = vsub.f32 %v17, %v1035
  %v1037 = vand.u32 %v1036, 4294901760
  %v1038 = vsub.f32 %v1036, %v1037
  %v1039 = vand.u32 %v1038, 4294901760
  %1040 = vmatpush.msra.mxu0 %v1039
  %v1041 = vand.u32 %v16, 4294901760
  %v1042 = vsub.f32 %v16, %v1041
  %v1043 = vand.u32 %v1042, 4294901760
  %v1044 = vsub.f32 %v1042, %v1043
  %v1045 = vand.u32 %v1044, 4294901760
  %1046 = vmatpush.msra.mxu0 %v1045
  %v1047 = vand.u32 %v15, 4294901760
  %v1048 = vsub.f32 %v15, %v1047
  %v1049 = vand.u32 %v1048, 4294901760
  %v1050 = vsub.f32 %v1048, %v1049
  %v1051 = vand.u32 %v1050, 4294901760
  %1052 = vmatpush.msra.mxu0 %v1051
  %v1053 = vand.u32 %v14, 4294901760
  %v1054 = vsub.f32 %v14, %v1053
  %v1055 = vand.u32 %v1054, 4294901760
  %v1056 = vsub.f32 %v1054, %v1055
  %v1057 = vand.u32 %v1056, 4294901760
  %1058 = vmatpush.msra.mxu0 %v1057
  %v1059 = vand.u32 %v992, 4294901760
  %1060 = vmatmul.f32.gmra.mxu0 %v1059
  %v1061 = vpop.f32.mrf.mxu0
  %v1062 = vadd.f32 %v1021, %v1061
  %1063 = vdwg.mxu0
  %1064 = vmatpush.msra.mxu0 0.0
  %1065 = vmatpush.msra.mxu0 0.0
  %1066 = vmatpush.msra.mxu0 0.0
  %1067 = vmatpush.msra.mxu0 0.0
  %1068 = vmatpush.msra.mxu0 0.0
  %1069 = vmatpush.msra.mxu0 0.0
  %1070 = vmatpush.msra.mxu0 0.0
  %1071 = vmatpush.msra.mxu0 0.0
  %1072 = vmatpush.msra.mxu0 0.0
  %1073 = vmatpush.msra.mxu0 0.0
  %1074 = vmatpush.msra.mxu0 0.0
  %1075 = vmatpush.msra.mxu0 0.0
  %v1076 = vand.u32 %v17, 4294901760
  %v1077 = vsub.f32 %v17, %v1076
  %1078 = vmatpush.msra.mxu0 %v1077
  %v1079 = vand.u32 %v16, 4294901760
  %v1080 = vsub.f32 %v16, %v1079
  %1081 = vmatpush.msra.mxu0 %v1080
  %v1082 = vand.u32 %v15, 4294901760
  %v1083 = vsub.f32 %v15, %v1082
  %1084 = vmatpush.msra.mxu0 %v1083
  %v1085 = vand.u32 %v14, 4294901760
  %v1086 = vsub.f32 %v14, %v1085
  %1087 = vmatpush.msra.mxu0 %v1086
  %v1088 = vand.u32 %v992, 4294901760
  %v1089 = vsub.f32 %v992, %v1088
  %1090 = vmatmul.f32.gmra.mxu0 %v1089
  %v1091 = vpop.f32.mrf.mxu0
  %v1092 = vadd.f32 %v1062, %v1091
  %1093 = vdwg.mxu0
  %1094 = vmatpush.msra.mxu0 0.0
  %1095 = vmatpush.msra.mxu0 0.0
  %1096 = vmatpush.msra.mxu0 0.0
  %1097 = vmatpush.msra.mxu0 0.0
  %1098 = vmatpush.msra.mxu0 0.0
  %1099 = vmatpush.msra.mxu0 0.0
  %1100 = vmatpush.msra.mxu0 0.0
  %1101 = vmatpush.msra.mxu0 0.0
  %1102 = vmatpush.msra.mxu0 0.0
  %1103 = vmatpush.msra.mxu0 0.0
  %1104 = vmatpush.msra.mxu0 0.0
  %1105 = vmatpush.msra.mxu0 0.0
  %v1106 = vand.u32 %v17, 4294901760
  %1107 = vmatpush.msra.mxu0 %v1106
  %v1108 = vand.u32 %v16, 4294901760
  %1109 = vmatpush.msra.mxu0 %v1108
  %v1110 = vand.u32 %v15, 4294901760
  %1111 = vmatpush.msra.mxu0 %v1110
  %v1112 = vand.u32 %v14, 4294901760
  %1113 = vmatpush.msra.mxu0 %v1112
  %v1114 = vand.u32 %v992, 4294901760
  %v1115 = vsub.f32 %v992, %v1114
  %v1116 = vand.u32 %v1115, 4294901760
  %1117 = vmatmul.f32.gmra.mxu0 %v1116
  %v1118 = vpop.f32.mrf.mxu0
  %v1119 = vadd.f32 %v1092, %v1118
  %1120 = vdwg.mxu0
  %1121 = vmatpush.msra.mxu0 0.0
  %1122 = vmatpush.msra.mxu0 0.0
  %1123 = vmatpush.msra.mxu0 0.0
  %1124 = vmatpush.msra.mxu0 0.0
  %1125 = vmatpush.msra.mxu0 0.0
  %1126 = vmatpush.msra.mxu0 0.0
  %1127 = vmatpush.msra.mxu0 0.0
  %1128 = vmatpush.msra.mxu0 0.0
  %1129 = vmatpush.msra.mxu0 0.0
  %1130 = vmatpush.msra.mxu0 0.0
  %1131 = vmatpush.msra.mxu0 0.0
  %1132 = vmatpush.msra.mxu0 0.0
  %v1133 = vand.u32 %v17, 4294901760
  %v1134 = vsub.f32 %v17, %v1133
  %v1135 = vand.u32 %v1134, 4294901760
  %1136 = vmatpush.msra.mxu0 %v1135
  %v1137 = vand.u32 %v16, 4294901760
  %v1138 = vsub.f32 %v16, %v1137
  %v1139 = vand.u32 %v1138, 4294901760
  %1140 = vmatpush.msra.mxu0 %v1139
  %v1141 = vand.u32 %v15, 4294901760
  %v1142 = vsub.f32 %v15, %v1141
  %v1143 = vand.u32 %v1142, 4294901760
  %1144 = vmatpush.msra.mxu0 %v1143
  %v1145 = vand.u32 %v14, 4294901760
  %v1146 = vsub.f32 %v14, %v1145
  %v1147 = vand.u32 %v1146, 4294901760
  %1148 = vmatpush.msra.mxu0 %v1147
  %v1149 = vand.u32 %v992, 4294901760
  %1150 = vmatmul.f32.gmra.mxu0 %v1149
  %v1151 = vpop.f32.mrf.mxu0
  %v1152 = vadd.f32 %v1119, %v1151
  %1153 = vdwg.mxu0
  %1154 = vmatpush.msra.mxu0 0.0
  %1155 = vmatpush.msra.mxu0 0.0
  %1156 = vmatpush.msra.mxu0 0.0
  %1157 = vmatpush.msra.mxu0 0.0
  %1158 = vmatpush.msra.mxu0 0.0
  %1159 = vmatpush.msra.mxu0 0.0
  %1160 = vmatpush.msra.mxu0 0.0
  %1161 = vmatpush.msra.mxu0 0.0
  %1162 = vmatpush.msra.mxu0 0.0
  %1163 = vmatpush.msra.mxu0 0.0
  %1164 = vmatpush.msra.mxu0 0.0
  %1165 = vmatpush.msra.mxu0 0.0
  %v1166 = vand.u32 %v17, 4294901760
  %1167 = vmatpush.msra.mxu0 %v1166
  %v1168 = vand.u32 %v16, 4294901760
  %1169 = vmatpush.msra.mxu0 %v1168
  %v1170 = vand.u32 %v15, 4294901760
  %1171 = vmatpush.msra.mxu0 %v1170
  %v1172 = vand.u32 %v14, 4294901760
  %1173 = vmatpush.msra.mxu0 %v1172
  %v1174 = vand.u32 %v992, 4294901760
  %1175 = vmatmul.f32.gmra.mxu0 %v1174
  %v1176 = vpop.f32.mrf.mxu0
  %v1177 = vadd.f32 %v1152, %v1176
  %1178 = vdwg.mxu0
  %v1179 = vadd.f32 %v990, %v1177
  %v1180 = vtanh.pop %v1179
  %s1181 = scalar_lea.vmem %s3, 20
  %1182 = vst.msk [vmem:[%s1181] sm:$0xf] %vm211, %v1180
  %s1183 = scalar_lea.vmem %s0, 24
  %v1184 = vld [vmem:[%s1183] sm:$0xf]
  %v1186 = vsel %vm20, %v1180, 0
  %1188 = vmatpush.msra.mxu0 0.0
  %1189 = vmatpush.msra.mxu0 0.0
  %1190 = vmatpush.msra.mxu0 0.0
  %1191 = vmatpush.msra.mxu0 0.0
  %1192 = vmatpush.msra.mxu0 0.0
  %1193 = vmatpush.msra.mxu0 0.0
  %1194 = vmatpush.msra.mxu0 0.0
  %1195 = vmatpush.msra.mxu0 0.0
  %1196 = vmatpush.msra.mxu0 0.0
  %1197 = vmatpush.msra.mxu0 0.0
  %1198 = vmatpush.msra.mxu0 0.0
  %1199 = vmatpush.msra.mxu0 0.0
  %v1200 = vand.u32 %v17, 4294901760
  %1201 = vmatpush.msra.mxu0 %v1200
  %v1202 = vand.u32 %v16, 4294901760
  %1203 = vmatpush.msra.mxu0 %v1202
  %v1204 = vand.u32 %v15, 4294901760
  %1205 = vmatpush.msra.mxu0 %v1204
  %v1206 = vand.u32 %v14, 4294901760
  %1207 = vmatpush.msra.mxu0 %v1206
  %v1208 = vand.u32 %v1186, 4294901760
  %v1209 = vsub.f32 %v1186, %v1208
  %v1210 = vand.u32 %v1209, 4294901760
  %v1211 = vsub.f32 %v1209, %v1210
  %v1212 = vand.u32 %v1211, 4294901760
  %1213 = vmatmul.f32.gmra.mxu0 %v1212
  %v1214 = vpop.f32.mrf.mxu0
  %v1215 = vadd.f32 0.0, %v1214
  %1216 = vdwg.mxu0
  %1217 = vmatpush.msra.mxu0 0.0
  %1218 = vmatpush.msra.mxu0 0.0
  %1219 = vmatpush.msra.mxu0 0.0
  %1220 = vmatpush.msra.mxu0 0.0
  %1221 = vmatpush.msra.mxu0 0.0
  %1222 = vmatpush.msra.mxu0 0.0
  %1223 = vmatpush.msra.mxu0 0.0
  %1224 = vmatpush.msra.mxu0 0.0
  %1225 = vmatpush.msra.mxu0 0.0
  %1226 = vmatpush.msra.mxu0 0.0
  %1227 = vmatpush.msra.mxu0 0.0
  %1228 = vmatpush.msra.mxu0 0.0
  %v1229 = vand.u32 %v17, 4294901760
  %v1230 = vsub.f32 %v17, %v1229
  %v1231 = vand.u32 %v1230, 4294901760
  %v1232 = vsub.f32 %v1230, %v1231
  %v1233 = vand.u32 %v1232, 4294901760
  %1234 = vmatpush.msra.mxu0 %v1233
  %v1235 = vand.u32 %v16, 4294901760
  %v1236 = vsub.f32 %v16, %v1235
  %v1237 = vand.u32 %v1236, 4294901760
  %v1238 = vsub.f32 %v1236, %v1237
  %v1239 = vand.u32 %v1238, 4294901760
  %1240 = vmatpush.msra.mxu0 %v1239
  %v1241 = vand.u32 %v15, 4294901760
  %v1242 = vsub.f32 %v15, %v1241
  %v1243 = vand.u32 %v1242, 4294901760
  %v1244 = vsub.f32 %v1242, %v1243
  %v1245 = vand.u32 %v1244, 4294901760
  %1246 = vmatpush.msra.mxu0 %v1245
  %v1247 = vand.u32 %v14, 4294901760
  %v1248 = vsub.f32 %v14, %v1247
  %v1249 = vand.u32 %v1248, 4294901760
  %v1250 = vsub.f32 %v1248, %v1249
  %v1251 = vand.u32 %v1250, 4294901760
  %1252 = vmatpush.msra.mxu0 %v1251
  %v1253 = vand.u32 %v1186, 4294901760
  %1254 = vmatmul.f32.gmra.mxu0 %v1253
  %v1255 = vpop.f32.mrf.mxu0
  %v1256 = vadd.f32 %v1215, %v1255
  %1257 = vdwg.mxu0
  %1258 = vmatpush.msra.mxu0 0.0
  %1259 = vmatpush.msra.mxu0 0.0
  %1260 = vmatpush.msra.mxu0 0.0
  %1261 = vmatpush.msra.mxu0 0.0
  %1262 = vmatpush.msra.mxu0 0.0
  %1263 = vmatpush.msra.mxu0 0.0
  %1264 = vmatpush.msra.mxu0 0.0
  %1265 = vmatpush.msra.mxu0 0.0
  %1266 = vmatpush.msra.mxu0 0.0
  %1267 = vmatpush.msra.mxu0 0.0
  %1268 = vmatpush.msra.mxu0 0.0
  %1269 = vmatpush.msra.mxu0 0.0
  %v1270 = vand.u32 %v17, 4294901760
  %v1271 = vsub.f32 %v17, %v1270
  %1272 = vmatpush.msra.mxu0 %v1271
  %v1273 = vand.u32 %v16, 4294901760
  %v1274 = vsub.f32 %v16, %v1273
  %1275 = vmatpush.msra.mxu0 %v1274
  %v1276 = vand.u32 %v15, 4294901760
  %v1277 = vsub.f32 %v15, %v1276
  %1278 = vmatpush.msra.mxu0 %v1277
  %v1279 = vand.u32 %v14, 4294901760
  %v1280 = vsub.f32 %v14, %v1279
  %1281 = vmatpush.msra.mxu0 %v1280
  %v1282 = vand.u32 %v1186, 4294901760
  %v1283 = vsub.f32 %v1186, %v1282
  %1284 = vmatmul.f32.gmra.mxu0 %v1283
  %v1285 = vpop.f32.mrf.mxu0
  %v1286 = vadd.f32 %v1256, %v1285
  %1287 = vdwg.mxu0
  %1288 = vmatpush.msra.mxu0 0.0
  %1289 = vmatpush.msra.mxu0 0.0
  %1290 = vmatpush.msra.mxu0 0.0
  %1291 = vmatpush.msra.mxu0 0.0
  %1292 = vmatpush.msra.mxu0 0.0
  %1293 = vmatpush.msra.mxu0 0.0
  %1294 = vmatpush.msra.mxu0 0.0
  %1295 = vmatpush.msra.mxu0 0.0
  %1296 = vmatpush.msra.mxu0 0.0
  %1297 = vmatpush.msra.mxu0 0.0
  %1298 = vmatpush.msra.mxu0 0.0
  %1299 = vmatpush.msra.mxu0 0.0
  %v1300 = vand.u32 %v17, 4294901760
  %1301 = vmatpush.msra.mxu0 %v1300
  %v1302 = vand.u32 %v16, 4294901760
  %1303 = vmatpush.msra.mxu0 %v1302
  %v1304 = vand.u32 %v15, 4294901760
  %1305 = vmatpush.msra.mxu0 %v1304
  %v1306 = vand.u32 %v14, 4294901760
  %1307 = vmatpush.msra.mxu0 %v1306
  %v1308 = vand.u32 %v1186, 4294901760
  %v1309 = vsub.f32 %v1186, %v1308
  %v1310 = vand.u32 %v1309, 4294901760
  %1311 = vmatmul.f32.gmra.mxu0 %v1310
  %v1312 = vpop.f32.mrf.mxu0
  %v1313 = vadd.f32 %v1286, %v1312
  %1314 = vdwg.mxu0
  %1315 = vmatpush.msra.mxu0 0.0
  %1316 = vmatpush.msra.mxu0 0.0
  %1317 = vmatpush.msra.mxu0 0.0
  %1318 = vmatpush.msra.mxu0 0.0
  %1319 = vmatpush.msra.mxu0 0.0
  %1320 = vmatpush.msra.mxu0 0.0
  %1321 = vmatpush.msra.mxu0 0.0
  %1322 = vmatpush.msra.mxu0 0.0
  %1323 = vmatpush.msra.mxu0 0.0
  %1324 = vmatpush.msra.mxu0 0.0
  %1325 = vmatpush.msra.mxu0 0.0
  %1326 = vmatpush.msra.mxu0 0.0
  %v1327 = vand.u32 %v17, 4294901760
  %v1328 = vsub.f32 %v17, %v1327
  %v1329 = vand.u32 %v1328, 4294901760
  %1330 = vmatpush.msra.mxu0 %v1329
  %v1331 = vand.u32 %v16, 4294901760
  %v1332 = vsub.f32 %v16, %v1331
  %v1333 = vand.u32 %v1332, 4294901760
  %1334 = vmatpush.msra.mxu0 %v1333
  %v1335 = vand.u32 %v15, 4294901760
  %v1336 = vsub.f32 %v15, %v1335
  %v1337 = vand.u32 %v1336, 4294901760
  %1338 = vmatpush.msra.mxu0 %v1337
  %v1339 = vand.u32 %v14, 4294901760
  %v1340 = vsub.f32 %v14, %v1339
  %v1341 = vand.u32 %v1340, 4294901760
  %1342 = vmatpush.msra.mxu0 %v1341
  %v1343 = vand.u32 %v1186, 4294901760
  %1344 = vmatmul.f32.gmra.mxu0 %v1343
  %v1345 = vpop.f32.mrf.mxu0
  %v1346 = vadd.f32 %v1313, %v1345
  %1347 = vdwg.mxu0
  %1348 = vmatpush.msra.mxu0 0.0
  %1349 = vmatpush.msra.mxu0 0.0
  %1350 = vmatpush.msra.mxu0 0.0
  %1351 = vmatpush.msra.mxu0 0.0
  %1352 = vmatpush.msra.mxu0 0.0
  %1353 = vmatpush.msra.mxu0 0.0
  %1354 = vmatpush.msra.mxu0 0.0
  %1355 = vmatpush.msra.mxu0 0.0
  %1356 = vmatpush.msra.mxu0 0.0
  %1357 = vmatpush.msra.mxu0 0.0
  %1358 = vmatpush.msra.mxu0 0.0
  %1359 = vmatpush.msra.mxu0 0.0
  %v1360 = vand.u32 %v17, 4294901760
  %1361 = vmatpush.msra.mxu0 %v1360
  %v1362 = vand.u32 %v16, 4294901760
  %1363 = vmatpush.msra.mxu0 %v1362
  %v1364 = vand.u32 %v15, 4294901760
  %1365 = vmatpush.msra.mxu0 %v1364
  %v1366 = vand.u32 %v14, 4294901760
  %1367 = vmatpush.msra.mxu0 %v1366
  %v1368 = vand.u32 %v1186, 4294901760
  %1369 = vmatmul.f32.gmra.mxu0 %v1368
  %v1370 = vpop.f32.mrf.mxu0
  %v1371 = vadd.f32 %v1346, %v1370
  %1372 = vdwg.mxu0
  %v1373 = vadd.f32 %v1184, %v1371
  %v1374 = vtanh.pop %v1373
  %s1375 = scalar_lea.vmem %s3, 24
  %1376 = vst.msk [vmem:[%s1375] sm:$0xf] %vm211, %v1374
  %s1377 = scalar_lea.vmem %s0, 28
  %v1378 = vld [vmem:[%s1377] sm:$0xf]
  %v1380 = vsel %vm20, %v1374, 0
  %1382 = vmatpush.msra.mxu0 0.0
  %1383 = vmatpush.msra.mxu0 0.0
  %1384 = vmatpush.msra.mxu0 0.0
  %1385 = vmatpush.msra.mxu0 0.0
  %1386 = vmatpush.msra.mxu0 0.0
  %1387 = vmatpush.msra.mxu0 0.0
  %1388 = vmatpush.msra.mxu0 0.0
  %1389 = vmatpush.msra.mxu0 0.0
  %1390 = vmatpush.msra.mxu0 0.0
  %1391 = vmatpush.msra.mxu0 0.0
  %1392 = vmatpush.msra.mxu0 0.0
  %1393 = vmatpush.msra.mxu0 0.0
  %v1394 = vand.u32 %v17, 4294901760
  %1395 = vmatpush.msra.mxu0 %v1394
  %v1396 = vand.u32 %v16, 4294901760
  %1397 = vmatpush.msra.mxu0 %v1396
  %v1398 = vand.u32 %v15, 4294901760
  %1399 = vmatpush.msra.mxu0 %v1398
  %v1400 = vand.u32 %v14, 4294901760
  %1401 = vmatpush.msra.mxu0 %v1400
  %v1402 = vand.u32 %v1380, 4294901760
  %v1403 = vsub.f32 %v1380, %v1402
  %v1404 = vand.u32 %v1403, 4294901760
  %v1405 = vsub.f32 %v1403, %v1404
  %v1406 = vand.u32 %v1405, 4294901760
  %1407 = vmatmul.f32.gmra.mxu0 %v1406
  %v1408 = vpop.f32.mrf.mxu0
  %v1409 = vadd.f32 0.0, %v1408
  %1410 = vdwg.mxu0
  %1411 = vmatpush.msra.mxu0 0.0
  %1412 = vmatpush.msra.mxu0 0.0
  %1413 = vmatpush.msra.mxu0 0.0
  %1414 = vmatpush.msra.mxu0 0.0
  %1415 = vmatpush.msra.mxu0 0.0
  %1416 = vmatpush.msra.mxu0 0.0
  %1417 = vmatpush.msra.mxu0 0.0
  %1418 = vmatpush.msra.mxu0 0.0
  %1419 = vmatpush.msra.mxu0 0.0
  %1420 = vmatpush.msra.mxu0 0.0
  %1421 = vmatpush.msra.mxu0 0.0
  %1422 = vmatpush.msra.mxu0 0.0
  %v1423 = vand.u32 %v17, 4294901760
  %v1424 = vsub.f32 %v17, %v1423
  %v1425 = vand.u32 %v1424, 4294901760
  %v1426 = vsub.f32 %v1424, %v1425
  %v1427 = vand.u32 %v1426, 4294901760
  %1428 = vmatpush.msra.mxu0 %v1427
  %v1429 = vand.u32 %v16, 4294901760
  %v1430 = vsub.f32 %v16, %v1429
  %v1431 = vand.u32 %v1430, 4294901760
  %v1432 = vsub.f32 %v1430, %v1431
  %v1433 = vand.u32 %v1432, 4294901760
  %1434 = vmatpush.msra.mxu0 %v1433
  %v1435 = vand.u32 %v15, 4294901760
  %v1436 = vsub.f32 %v15, %v1435
  %v1437 = vand.u32 %v1436, 4294901760
  %v1438 = vsub.f32 %v1436, %v1437
  %v1439 = vand.u32 %v1438, 4294901760
  %1440 = vmatpush.msra.mxu0 %v1439
  %v1441 = vand.u32 %v14, 4294901760
  %v1442 = vsub.f32 %v14, %v1441
  %v1443 = vand.u32 %v1442, 4294901760
  %v1444 = vsub.f32 %v1442, %v1443
  %v1445 = vand.u32 %v1444, 4294901760
  %1446 = vmatpush.msra.mxu0 %v1445
  %v1447 = vand.u32 %v1380, 4294901760
  %1448 = vmatmul.f32.gmra.mxu0 %v1447
  %v1449 = vpop.f32.mrf.mxu0
  %v1450 = vadd.f32 %v1409, %v1449
  %1451 = vdwg.mxu0
  %1452 = vmatpush.msra.mxu0 0.0
  %1453 = vmatpush.msra.mxu0 0.0
  %1454 = vmatpush.msra.mxu0 0.0
  %1455 = vmatpush.msra.mxu0 0.0
  %1456 = vmatpush.msra.mxu0 0.0
  %1457 = vmatpush.msra.mxu0 0.0
  %1458 = vmatpush.msra.mxu0 0.0
  %1459 = vmatpush.msra.mxu0 0.0
  %1460 = vmatpush.msra.mxu0 0.0
  %1461 = vmatpush.msra.mxu0 0.0
  %1462 = vmatpush.msra.mxu0 0.0
  %1463 = vmatpush.msra.mxu0 0.0
  %v1464 = vand.u32 %v17, 4294901760
  %v1465 = vsub.f32 %v17, %v1464
  %1466 = vmatpush.msra.mxu0 %v1465
  %v1467 = vand.u32 %v16, 4294901760
  %v1468 = vsub.f32 %v16, %v1467
  %1469 = vmatpush.msra.mxu0 %v1468
  %v1470 = vand.u32 %v15, 4294901760
  %v1471 = vsub.f32 %v15, %v1470
  %1472 = vmatpush.msra.mxu0 %v1471
  %v1473 = vand.u32 %v14, 4294901760
  %v1474 = vsub.f32 %v14, %v1473
  %1475 = vmatpush.msra.mxu0 %v1474
  %v1476 = vand.u32 %v1380, 4294901760
  %v1477 = vsub.f32 %v1380, %v1476
  %1478 = vmatmul.f32.gmra.mxu0 %v1477
  %v1479 = vpop.f32.mrf.mxu0
  %v1480 = vadd.f32 %v1450, %v1479
  %1481 = vdwg.mxu0
  %1482 = vmatpush.msra.mxu0 0.0
  %1483 = vmatpush.msra.mxu0 0.0
  %1484 = vmatpush.msra.mxu0 0.0
  %1485 = vmatpush.msra.mxu0 0.0
  %1486 = vmatpush.msra.mxu0 0.0
  %1487 = vmatpush.msra.mxu0 0.0
  %1488 = vmatpush.msra.mxu0 0.0
  %1489 = vmatpush.msra.mxu0 0.0
  %1490 = vmatpush.msra.mxu0 0.0
  %1491 = vmatpush.msra.mxu0 0.0
  %1492 = vmatpush.msra.mxu0 0.0
  %1493 = vmatpush.msra.mxu0 0.0
  %v1494 = vand.u32 %v17, 4294901760
  %1495 = vmatpush.msra.mxu0 %v1494
  %v1496 = vand.u32 %v16, 4294901760
  %1497 = vmatpush.msra.mxu0 %v1496
  %v1498 = vand.u32 %v15, 4294901760
  %1499 = vmatpush.msra.mxu0 %v1498
  %v1500 = vand.u32 %v14, 4294901760
  %1501 = vmatpush.msra.mxu0 %v1500
  %v1502 = vand.u32 %v1380, 4294901760
  %v1503 = vsub.f32 %v1380, %v1502
  %v1504 = vand.u32 %v1503, 4294901760
  %1505 = vmatmul.f32.gmra.mxu0 %v1504
  %v1506 = vpop.f32.mrf.mxu0
  %v1507 = vadd.f32 %v1480, %v1506
  %1508 = vdwg.mxu0
  %1509 = vmatpush.msra.mxu0 0.0
  %1510 = vmatpush.msra.mxu0 0.0
  %1511 = vmatpush.msra.mxu0 0.0
  %1512 = vmatpush.msra.mxu0 0.0
  %1513 = vmatpush.msra.mxu0 0.0
  %1514 = vmatpush.msra.mxu0 0.0
  %1515 = vmatpush.msra.mxu0 0.0
  %1516 = vmatpush.msra.mxu0 0.0
  %1517 = vmatpush.msra.mxu0 0.0
  %1518 = vmatpush.msra.mxu0 0.0
  %1519 = vmatpush.msra.mxu0 0.0
  %1520 = vmatpush.msra.mxu0 0.0
  %v1521 = vand.u32 %v17, 4294901760
  %v1522 = vsub.f32 %v17, %v1521
  %v1523 = vand.u32 %v1522, 4294901760
  %1524 = vmatpush.msra.mxu0 %v1523
  %v1525 = vand.u32 %v16, 4294901760
  %v1526 = vsub.f32 %v16, %v1525
  %v1527 = vand.u32 %v1526, 4294901760
  %1528 = vmatpush.msra.mxu0 %v1527
  %v1529 = vand.u32 %v15, 4294901760
  %v1530 = vsub.f32 %v15, %v1529
  %v1531 = vand.u32 %v1530, 4294901760
  %1532 = vmatpush.msra.mxu0 %v1531
  %v1533 = vand.u32 %v14, 4294901760
  %v1534 = vsub.f32 %v14, %v1533
  %v1535 = vand.u32 %v1534, 4294901760
  %1536 = vmatpush.msra.mxu0 %v1535
  %v1537 = vand.u32 %v1380, 4294901760
  %1538 = vmatmul.f32.gmra.mxu0 %v1537
  %v1539 = vpop.f32.mrf.mxu0
  %v1540 = vadd.f32 %v1507, %v1539
  %1541 = vdwg.mxu0
  %1542 = vmatpush.msra.mxu0 0.0
  %1543 = vmatpush.msra.mxu0 0.0
  %1544 = vmatpush.msra.mxu0 0.0
  %1545 = vmatpush.msra.mxu0 0.0
  %1546 = vmatpush.msra.mxu0 0.0
  %1547 = vmatpush.msra.mxu0 0.0
  %1548 = vmatpush.msra.mxu0 0.0
  %1549 = vmatpush.msra.mxu0 0.0
  %1550 = vmatpush.msra.mxu0 0.0
  %1551 = vmatpush.msra.mxu0 0.0
  %1552 = vmatpush.msra.mxu0 0.0
  %1553 = vmatpush.msra.mxu0 0.0
  %v1554 = vand.u32 %v17, 4294901760
  %1555 = vmatpush.msra.mxu0 %v1554
  %v1556 = vand.u32 %v16, 4294901760
  %1557 = vmatpush.msra.mxu0 %v1556
  %v1558 = vand.u32 %v15, 4294901760
  %1559 = vmatpush.msra.mxu0 %v1558
  %v1560 = vand.u32 %v14, 4294901760
  %1561 = vmatpush.msra.mxu0 %v1560
  %v1562 = vand.u32 %v1380, 4294901760
  %1563 = vmatmul.f32.gmra.mxu0 %v1562
  %v1564 = vpop.f32.mrf.mxu0
  %v1565 = vadd.f32 %v1540, %v1564
  %1566 = vdwg.mxu0
  %v1567 = vadd.f32 %v1378, %v1565
  %v1568 = vtanh.pop %v1567
  %s1569 = scalar_lea.vmem %s3, 28
  %1570 = vst.msk [vmem:[%s1569] sm:$0xf] %vm211, %v1568
  // Predicated region
  $region14: #{rnn_forward.1} parent=0 // pred_check
    _
  $region15: #{rnn_forward.1} parent=0 // pred_check_branch
    %1572 = sbr.rel (0) target = $region17
  $region16: #{rnn_forward.1} parent=0 // pred_region
    _
  $region17: #{rnn_forward.1} parent=0 // pred_fallthru
    _
  // Predicated region
  $region18: #{rnn_forward.1} parent=0 // pred_check
    _
  $region19: #{rnn_forward.1} parent=0 // pred_check_branch
    %1574 = sbr.rel (0) target = $region21
  $region20: #{rnn_forward.1} parent=0 // pred_region
    _
  $region21: #{rnn_forward.1} parent=0 // pred_fallthru
    _

</llo_original>
